<compile_context>
chip_gen: v6e
topology: v6e:2x2x1
jax: 0.10.0
libtpu: 0.0.40
codegen_flags: <defaults>
</compile_context>

<pallas_src>
import functools
import math

import numpy as np

import jax
import jax.numpy as jnp
from jax import lax
from jax.experimental import pallas as pl
from jax.experimental.pallas import tpu as pltpu


def _layernorm(x, gamma, beta, eps=1e-5):
    mu = jnp.mean(x, axis=-1, keepdims=True)
    var = jnp.mean((x - mu) ** 2, axis=-1, keepdims=True)
    return (x - mu) * lax.rsqrt(var + eps) * gamma + beta


# --------------------------------------------------------------------------- #
# Fused kernel: one grid step == one batch element.
# --------------------------------------------------------------------------- #
def fused_gcnnet_kernel(x_ref, pos_ref, post_ref,
                        ew_ref, eb_ref, eg_ref, ebe_ref,
                        tpw_ref, tpb_ref, gw_ref, lg_ref, lb_ref,
                        s_ref, hw_ref, hb_ref,
                        head_ref, *rel_ref,
                        NG, NFR, NFG, T, NP, MAX_N, pos_thr_sq, mm_dtype):
    f32 = jnp.float32
    TNP = T * NP

    # ---- 1. fc_emb_1 + LayerNorm([NFB]) + ReLU ------------------------------
    x = x_ref[0]                                                    # (TNP, K*K*D)
    y = jnp.dot(x, ew_ref[...], preferred_element_type=f32) + eb_ref[...]
    feats = jnp.maximum(_layernorm(y, eg_ref[...], ebe_ref[...]), 0.0)  # (TNP,NFB)

    # ---- 2. pad-row / pad-column validity + position mask (all in-kernel) ---
    row_ids = lax.broadcasted_iota(jnp.int32, (TNP, 1), 0)
    col_ids = lax.broadcasted_iota(jnp.int32, (1, TNP), 1)
    row_valid = (row_ids % NP) < MAX_N                              # (TNP, 1)
    col_valid = (col_ids % NP) < MAX_N                              # (1, TNP)
    feats = jnp.where(row_valid, feats, 0.0)                        # zero pad rows

    p = pos_ref[0]                                                  # (TNP, 2)
    pt = post_ref[0]                                                # (2, TNP)
    dx = p[:, 0:1] - pt[0:1, :]
    dy = p[:, 1:2] - pt[1:2, :]
    d2 = dx * dx + dy * dy                                          # dist^2
    # dist > thr  <=>  dist^2 > thr^2 ; pad columns always masked.
    masked = jnp.logical_or(d2 > pos_thr_sq, jnp.logical_not(col_valid))

    # ---- 3. GCN module (lane-dense theta||phi projection, static NG loop) ---
    feats_mm = feats.astype(mm_dtype)
    tp = jnp.dot(feats_mm, tpw_ref[...], preferred_element_type=f32) + tpb_ref[...]
    inv_sqrt_nfr = 1.0 / math.sqrt(NFR)

    aggs = []
    rel_last = None
    for i in range(NG):                                             # NG static & small
        theta = tp[:, 2 * i * NFR:(2 * i + 1) * NFR].astype(mm_dtype)
        phi = tp[:, (2 * i + 1) * NFR:(2 * i + 2) * NFR].astype(mm_dtype)
        sim = lax.dot_general(theta, phi, (((1,), (1,)), ((), ())),
                              preferred_element_type=f32) * inv_sqrt_nfr
        rel = jnp.where(masked, -1e30, sim)       # finite fill: no NaN rows
        m = jnp.max(rel, axis=-1, keepdims=True)
        e = jnp.exp(rel - m)
        den = jnp.sum(e, axis=-1, keepdims=True)
        r = pl.reciprocal(den, approx=True)
        r = r * (2.0 - den * r)                   # one Newton step -> ~f32 accuracy
        rel = e * r
        aggs.append(jnp.dot(rel.astype(mm_dtype), feats_mm,
                            preferred_element_type=f32))            # (TNP, NFG)
        rel_last = rel

    if rel_ref:                                   # optional relation-graph output
        rel_ref[0][0] = rel_last

    # ONE block-diagonal fc_gcn matmul for all NG groups, then per-group LN+ReLU
    agg_all = jnp.concatenate(aggs, axis=-1) if NG > 1 else aggs[0]  # (TNP,NG*NFG)
    one_all = jnp.dot(agg_all.astype(mm_dtype), gw_ref[...],
                      preferred_element_type=f32)
    lg = lg_ref[...]
    lb = lb_ref[...]
    acc = jnp.zeros((TNP, NFG), f32)
    for i in range(NG):
        one = _layernorm(one_all[:, i * NFG:(i + 1) * NFG],
                         lg[:, i * NFG:(i + 1) * NFG],
                         lb[:, i * NFG:(i + 1) * NFG])
        acc = acc + jnp.maximum(one, 0.0)

    # ---- 4. residual + heads -------------------------------------------------
    # TODO(synk): nn.Dropout is stochastic in train mode; applied as identity (eval).
    states = acc + feats                                            # (TNP, NFG)

    # frame-mean via one MXU matmul with the constant (NP, TNP) averaging matrix
    s_mean = jnp.dot(s_ref[...], states, preferred_element_type=f32)  # (NP, NFG)

    # frame max-pool over valid rows only (sublane-aligned NP-row slices)
    states_m = jnp.where(row_valid, states, -1e30)
    pooled = jnp.max(states_m[0:NP], axis=0, keepdims=True)
    for t in range(1, T):                                           # T static & small
        pooled = pooled + jnp.max(states_m[t * NP:(t + 1) * NP], axis=0,
                                  keepdims=True)
    pooled = pooled * (1.0 / T)

    # single lane-dense head matmul: rows 0..NP-1 -> actions, rows NP.. -> activities
    head_lhs = jnp.concatenate(
        [s_mean, jnp.broadcast_to(pooled, (NP, NFG))], axis=0)      # (2*NP, NFG)
    head = jnp.dot(head_lhs.astype(mm_dtype), hw_ref[...],
                   preferred_element_type=f32) + hb_ref[...]
    head_ref[0] = head


# --------------------------------------------------------------------------- #
# Forward (starting from RoI-aligned per-box features).
# --------------------------------------------------------------------------- #
def gcnnet_collective_forward(roi_box_features, boxes_in, bboxes_num_in, params, cfg,
                              *, return_relation_graph=False,
                              matmul_dtype=jnp.float32):
    # TODO(synk): MyInception_v3 backbone (pretrained) + RoIAlign have no clean
    # in-script Pallas equivalent; roi_box_features stands in for
    # roi_align(backbone(images)).reshape(B*T, MAX_N, K*K*D).
    # TODO(synk): ragged per-sample N (bboxes_num_in < MAX_N) would need a
    # per-sample row mask (scalar prefetch); the example data uses N == MAX_N.
    # TODO(synk): eval-mode 3-crop averaging (B*3 / T//3 reshuffle) not modeled.
    del bboxes_num_in
    B, T, MAX_N = cfg["B"], cfg["T"], cfg["MAX_N"]
    NFB, NFG, NFR, NG = cfg["NFB"], cfg["NFG"], cfg["NFR"], cfg["NG"]
    A, Y = cfg["num_actions"], cfg["num_activities"]
    OW, pos_threshold = cfg["OW"], cfg["pos_threshold"]
    assert NFB == NFG, "collective GCN feeds box features straight into the GCN"
    KKD = roi_box_features.shape[-1]
    dt = matmul_dtype

    NP = ((MAX_N + 7) // 8) * 8               # boxes/frame padded to sublane multiple
    TNP = T * NP
    HPAD = max(128, ((A + Y + 127) // 128) * 128)   # lane-dense head output width

    # ---- pad inputs along the box axis (pad rows neutralised in-kernel) ------
    roi = roi_box_features.reshape(B, T, MAX_N, KKD).astype(jnp.float32)
    roi = jnp.pad(roi, ((0, 0), (0, 0), (0, NP - MAX_N), (0, 0)))
    x = roi.reshape(B, TNP, KKD).astype(dt)

    b4 = boxes_in.reshape(B, T, MAX_N, 4).astype(jnp.float32)
    b4 = jnp.pad(b4, ((0, 0), (0, 0), (0, NP - MAX_N), (0, 0))).reshape(B, TNP, 4)
    pos = (b4[..., 0:2] + b4[..., 2:4]) * 0.5                       # (B, TNP, 2)
    pos_t = jnp.swapaxes(pos, 1, 2)                                 # (B, 2, TNP)

    # ---- weight packing (tiny glue, traced once under jit) -------------------
    # Only the LAST GCN layer affects the output: the PyTorch loop feeds the
    # ORIGINAL box features to every gcn_list layer and keeps only the final
    # result, so earlier layers are dead compute.
    # TODO(synk): for gcn_layers>1 the PyTorch code also mutates the box
    # positions in place across layers; irrelevant here since only layer -1 is live.
    gp = params["gcn"][-1]
    tpw = jnp.concatenate([gp["theta_w"], gp["phi_w"]], axis=2)     # (NG,NFG,2NFR)
    tpw = jnp.transpose(tpw, (1, 0, 2)).reshape(NFG, 2 * NG * NFR).astype(dt)
    tpb = jnp.concatenate([gp["theta_b"], gp["phi_b"]], axis=2)     # (NG,1,2NFR)
    tpb = jnp.transpose(tpb, (1, 0, 2)).reshape(1, 2 * NG * NFR)

    # block-diagonal fc_gcn weight -> ONE matmul for all NG groups
    gw_bd = jnp.zeros((NG * NFG, NG * NFG), jnp.float32)
    for i in range(NG):
        gw_bd = gw_bd.at[i * NFG:(i + 1) * NFG, i * NFG:(i + 1) * NFG].set(
            gp["gcn_w"][i])
    gw_bd = gw_bd.astype(dt)
    lg = gp["ln_g"].reshape(1, NG * NFG)
    lb = gp["ln_b"].reshape(1, NG * NFG)

    # packed, lane-padded head weights: [fc_actions | fc_activities | 0-pad]
    hw = jnp.zeros((NFG, HPAD), jnp.float32)
    hw = hw.at[:, :A].set(params["fc_actions_w"])
    hw = hw.at[:, A:A + Y].set(params["fc_activities_w"])
    hw = hw.astype(dt)
    hb = jnp.zeros((1, HPAD), jnp.float32)
    hb = hb.at[:, :A].set(params["fc_actions_b"])
    hb = hb.at[:, A:A + Y].set(params["fc_activities_b"])

    # constant frame-averaging matrix: s_mean = S @ states (one MXU op)
    S = np.zeros((NP, TNP), np.float32)
    for t in range(T):
        S[np.arange(NP), t * NP + np.arange(NP)] = 1.0 / T
    S = jnp.asarray(S)

    ew = params["fc_emb_w"].astype(dt)

    kernel = functools.partial(
        fused_gcnnet_kernel,
        NG=NG, NFR=NFR, NFG=NFG, T=T, NP=NP, MAX_N=MAX_N,
        pos_thr_sq=float((pos_threshold * OW) ** 2), mm_dtype=dt)

    def fixed(shape):
        # Grid-invariant weight blocks (index_map constant). TODO(synk): marking
        # them pl.Buffered(1) would halve their VMEM footprint at large sizes;
        # left at the default pipeline mode for lowering portability.
        n = len(shape)
        return pl.BlockSpec(shape, lambda b, _n=n: (0,) * _n)

    in_specs = [
        pl.BlockSpec((1, TNP, KKD), lambda b: (b, 0, 0)),
        pl.BlockSpec((1, TNP, 2), lambda b: (b, 0, 0)),
        pl.BlockSpec((1, 2, TNP), lambda b: (b, 0, 0)),
        fixed((KKD, NFB)), fixed((1, NFB)), fixed((1, NFB)), fixed((1, NFB)),
        fixed((NFG, 2 * NG * NFR)), fixed((1, 2 * NG * NFR)),
        fixed((NG * NFG, NG * NFG)), fixed((1, NG * NFG)), fixed((1, NG * NFG)),
        fixed((NP, TNP)),
        fixed((NFG, HPAD)), fixed((1, HPAD)),
    ]
    out_shape = [jax.ShapeDtypeStruct((B, 2 * NP, HPAD), jnp.float32)]
    out_specs = [pl.BlockSpec((1, 2 * NP, HPAD), lambda b: (b, 0, 0))]
    if return_relation_graph:
        out_shape.append(jax.ShapeDtypeStruct((B, TNP, TNP), jnp.float32))
        out_specs.append(pl.BlockSpec((1, TNP, TNP), lambda b: (b, 0, 0)))

    # grid=(B,) "parallel": one sample per TensorCore on v7x (B>=2 uses both
    # cores); on 1-TC chips (v5e/v6e) this is a short serial loop.
    # TODO(synk): at production sizes (NFB=NFG=1024, D~1056) fc_emb_w must be
    # K-tiled over an extra "arbitrary" grid axis (P3 accumulator pattern) and
    # vmem_limit_bytes budgeted for the 64 MiB v7x VMEM; resident blocks are
    # fine at these toy sizes.
    outs = pl.pallas_call(
        kernel,
        out_shape=tuple(out_shape),
        grid=(B,),
        in_specs=in_specs,
        out_specs=tuple(out_specs),
        compiler_params=pltpu.CompilerParams(dimension_semantics=("parallel",)),
    )(x, pos, pos_t,
      ew, params["fc_emb_b"], params["nl_emb_g"], params["nl_emb_b"],
      tpw, tpb, gw_bd, lg, lb, S, hw, hb)

    head = outs[0]
    actions_scores = head[:, :MAX_N, :A].reshape(B * MAX_N, A)      # cat over batch
    activities_scores = head[:, NP, A:A + Y]                        # (B, Y)
    if return_relation_graph:
        idx = np.concatenate([t * NP + np.arange(MAX_N) for t in range(T)])
        rel = outs[1][:, idx][:, :, idx]                            # (B, TN, TN)
        return actions_scores, activities_scores, rel
    return actions_scores, activities_scores


# --------------------------------------------------------------------------- #
# Pure-JAX reference (in-script sanity check).
# --------------------------------------------------------------------------- #
def _reference_forward(roi, boxes_in, params, cfg):
    B, T, MAX_N = cfg["B"], cfg["T"], cfg["MAX_N"]
    NFG, NFR, NG = cfg["NFG"], cfg["NFR"], cfg["NG"]
    TN = T * MAX_N
    KKD = roi.shape[-1]

    x = roi.reshape(B * TN, KKD).astype(jnp.float32)
    y = x @ params["fc_emb_w"] + params["fc_emb_b"]
    mu = y.mean(-1, keepdims=True)
    var = ((y - mu) ** 2).mean(-1, keepdims=True)
    y = (y - mu) / jnp.sqrt(var + 1e-5) * params["nl_emb_g"] + params["nl_emb_b"]
    feats = jnp.maximum(y, 0.0).reshape(B, TN, NFG)

    b4 = boxes_in.reshape(B, TN, 4).astype(jnp.float32)
    p = (b4[..., 0:2] + b4[..., 2:4]) * 0.5
    d2 = jnp.sum((p[:, :, None, :] - p[:, None, :, :]) ** 2, axis=-1)
    masked = d2 > (cfg["pos_threshold"] * cfg["OW"]) ** 2

    gp = params["gcn"][-1]                   # only the last layer is live (see above)
    acc = jnp.zeros_like(feats)
    rel_last = None
    for i in range(NG):
        theta = feats @ gp["theta_w"][i] + gp["theta_b"][i]
        phi = feats @ gp["phi_w"][i] + gp["phi_b"][i]
        sim = jnp.einsum("bik,bjk->bij", theta, phi) / jnp.sqrt(float(NFR))
        rel = jax.nn.softmax(jnp.where(masked, -1e30, sim), axis=-1)
        one = jnp.einsum("bij,bjf->bif", rel, feats) @ gp["gcn_w"][i]
        mu = one.mean(-1, keepdims=True)
        var = ((one - mu) ** 2).mean(-1, keepdims=True)
        one = (one - mu) / jnp.sqrt(var + 1e-5) * gp["ln_g"][i] + gp["ln_b"][i]
        acc = acc + jnp.maximum(one, 0.0)
        rel_last = rel

    states = (acc + feats).reshape(B, T, MAX_N, NFG)
    actn = states @ params["fc_actions_w"] + params["fc_actions_b"]     # (B,T,N,A)
    actn = actn.mean(axis=1).reshape(B * MAX_N, -1)
    pooled = states.max(axis=2)                                         # (B,T,NFG)
    acty = (pooled @ params["fc_activities_w"] + params["fc_activities_b"]).mean(axis=1)
    return actn, acty, rel_last


# --------------------------------------------------------------------------- #
# Deterministic parameter init (kaiming-normal weights, zero biases, LN g=1/b=0)
# — weights stored pre-transposed as (in, out).
# --------------------------------------------------------------------------- #
def init_params(key, cfg):
    KKD = cfg["K"] * cfg["K"] * cfg["D"]
    NFB, NFG, NFR, NG = cfg["NFB"], cfg["NFG"], cfg["NFR"], cfg["NG"]
    A, Y = cfg["num_actions"], cfg["num_activities"]
    ks = jax.random.split(key, 3 + cfg["gcn_layers"])

    def kaiming(k, fan_in, shape):
        return jax.random.normal(k, shape, jnp.float32) * jnp.sqrt(2.0 / fan_in)

    params = {
        "fc_emb_w": kaiming(ks[0], KKD, (KKD, NFB)),
        "fc_emb_b": jnp.zeros((1, NFB), jnp.float32),
        "nl_emb_g": jnp.ones((1, NFB), jnp.float32),
        "nl_emb_b": jnp.zeros((1, NFB), jnp.float32),
        "fc_actions_w": kaiming(ks[1], NFG, (NFG, A)),
        "fc_actions_b": jnp.zeros((1, A), jnp.float32),
        "fc_activities_w": kaiming(ks[2], NFG, (NFG, Y)),
        "fc_activities_b": jnp.zeros((1, Y), jnp.float32),
        "gcn": [],
    }
    for layer in range(cfg["gcn_layers"]):
        kl = jax.random.split(ks[3 + layer], 3)
        params["gcn"].append({
            "theta_w": kaiming(kl[0], NFG, (NG, NFG, NFR)),
            "theta_b": jnp.zeros((NG, 1, NFR), jnp.float32),
            "phi_w": kaiming(kl[1], NFG, (NG, NFG, NFR)),
            "phi_b": jnp.zeros((NG, 1, NFR), jnp.float32),
            "gcn_w": kaiming(kl[2], NFG, (NG, NFG, NFG)),
            "ln_g": jnp.ones((NG, 1, NFG), jnp.float32),
            "ln_b": jnp.zeros((NG, 1, NFG), jnp.float32),
        })
    return params


if __name__ == "__main__":
    cfg = dict(
        B=2, T=3, MAX_N=6,            # batch, frames, num_boxes
        K=2, D=16,                    # crop_size[0], emb_features -> K*K*D = 64
        NFB=32, NFG=32, NFR=32,       # num_features_boxes / gcn / relation
        NG=2, gcn_layers=1,
        num_actions=6, num_activities=5,
        OH=8, OW=8, pos_threshold=0.2,
    )
    key = jax.random.PRNGKey(0)
    kp, kx, kb = jax.random.split(key, 3)
    params = init_params(kp, cfg)

    KKD = cfg["K"] * cfg["K"] * cfg["D"]
    roi_box_features = jax.random.normal(
        kx, (cfg["B"] * cfg["T"], cfg["MAX_N"], KKD), jnp.float32)
    boxes_in = jax.random.uniform(
        kb, (cfg["B"], cfg["T"], cfg["MAX_N"], 4), jnp.float32,
        minval=0.0, maxval=float(cfg["OW"]))
    bboxes_num_in = jnp.full((cfg["B"], cfg["T"]), cfg["MAX_N"], jnp.int32)

    # f32 path (+ optional relation-graph output) — checked against reference.
    fwd = jax.jit(functools.partial(gcnnet_collective_forward, cfg=cfg,
                                    return_relation_graph=True))
    actions_scores, activities_scores, relation_graph = fwd(
        roi_box_features, boxes_in, bboxes_num_in, params)
    jax.block_until_ready((actions_scores, activities_scores, relation_graph))

    assert actions_scores.shape == (cfg["B"] * cfg["MAX_N"], cfg["num_actions"])
    assert activities_scores.shape == (cfg["B"], cfg["num_activities"])
    assert relation_graph.shape == (cfg["B"], cfg["T"] * cfg["MAX_N"],
                                    cfg["T"] * cfg["MAX_N"])

    ra, ry, rr = _reference_forward(roi_box_features, boxes_in, params, cfg)
    # tolerance covers default TPU matmul precision differences; the approx
    # reciprocal is Newton-refined and no longer a meaningful error source.
    np.testing.assert_allclose(np.asarray(actions_scores), np.asarray(ra),
                               rtol=3e-2, atol=3e-2)
    np.testing.assert_allclose(np.asarray(activities_scores), np.asarray(ry),
                               rtol=3e-2, atol=3e-2)
    np.testing.assert_allclose(np.asarray(relation_graph), np.asarray(rr),
                               rtol=3e-2, atol=3e-2)

    # bf16-MXU production path (recommended on v6e/v7x) — default outputs only.
    fwd_bf16 = jax.jit(functools.partial(gcnnet_collective_forward, cfg=cfg,
                                         matmul_dtype=jnp.bfloat16))
    a16, y16 = fwd_bf16(roi_box_features, boxes_in, bboxes_num_in, params)
    jax.block_until_ready((a16, y16))
    assert a16.shape == actions_scores.shape and y16.shape == activities_scores.shape
    assert bool(jnp.all(jnp.isfinite(a16))) and bool(jnp.all(jnp.isfinite(y16)))
    np.testing.assert_allclose(np.asarray(a16), np.asarray(ra), rtol=0.3, atol=0.5)
    np.testing.assert_allclose(np.asarray(y16), np.asarray(ry), rtol=0.3, atol=0.5)

    print("KERNEL_OK")
</pallas_src>

<mosaic_0001>
module attributes {stable_mosaic.version = 11 : i64} {
  func.func @fused_gcnnet_kernel(%arg0: i32, %arg1: memref<1x24x64xf32, #tpu.memory_space<vmem>>, %arg2: memref<1x24x2xf32, #tpu.memory_space<vmem>>, %arg3: memref<1x2x24xf32, #tpu.memory_space<vmem>>, %arg4: memref<64x32xf32, #tpu.memory_space<vmem>>, %arg5: memref<1x32xf32, #tpu.memory_space<vmem>>, %arg6: memref<1x32xf32, #tpu.memory_space<vmem>>, %arg7: memref<1x32xf32, #tpu.memory_space<vmem>>, %arg8: memref<32x128xf32, #tpu.memory_space<vmem>>, %arg9: memref<1x128xf32, #tpu.memory_space<vmem>>, %arg10: memref<64x64xf32, #tpu.memory_space<vmem>>, %arg11: memref<1x64xf32, #tpu.memory_space<vmem>>, %arg12: memref<1x64xf32, #tpu.memory_space<vmem>>, %arg13: memref<8x24xf32, #tpu.memory_space<vmem>>, %arg14: memref<32x128xf32, #tpu.memory_space<vmem>>, %arg15: memref<1x128xf32, #tpu.memory_space<vmem>>, %arg16: memref<1x16x128xf32, #tpu.memory_space<vmem>>, %arg17: memref<1x24x24xf32, #tpu.memory_space<vmem>>) attributes {dimension_semantics = [#tpu.dimension_semantics<parallel>], iteration_bounds = array<i64: 2>, scalar_prefetch = 0 : i64, scratch_operands = 0 : i64, tpu.core_type = #tpu.core_type<tc>, window_params = [{transform_indices = @transform_0, window_bounds = array<i64: 1, 24, 64>}, {transform_indices = @transform_1, window_bounds = array<i64: 1, 24, 2>}, {transform_indices = @transform_2, window_bounds = array<i64: 1, 2, 24>}, {pipeline_mode = #tpu.pipeline_mode<synchronous>, transform_indices = @transform_3, window_bounds = array<i64: 64, 32>}, {pipeline_mode = #tpu.pipeline_mode<synchronous>, transform_indices = @transform_4, window_bounds = array<i64: 1, 32>}, {pipeline_mode = #tpu.pipeline_mode<synchronous>, transform_indices = @transform_5, window_bounds = array<i64: 1, 32>}, {pipeline_mode = #tpu.pipeline_mode<synchronous>, transform_indices = @transform_6, window_bounds = array<i64: 1, 32>}, {pipeline_mode = #tpu.pipeline_mode<synchronous>, transform_indices = @transform_7, window_bounds = array<i64: 32, 128>}, {pipeline_mode = #tpu.pipeline_mode<synchronous>, transform_indices = @transform_8, window_bounds = array<i64: 1, 128>}, {pipeline_mode = #tpu.pipeline_mode<synchronous>, transform_indices = @transform_9, window_bounds = array<i64: 64, 64>}, {pipeline_mode = #tpu.pipeline_mode<synchronous>, transform_indices = @transform_10, window_bounds = array<i64: 1, 64>}, {pipeline_mode = #tpu.pipeline_mode<synchronous>, transform_indices = @transform_11, window_bounds = array<i64: 1, 64>}, {pipeline_mode = #tpu.pipeline_mode<synchronous>, transform_indices = @transform_12, window_bounds = array<i64: 8, 24>}, {pipeline_mode = #tpu.pipeline_mode<synchronous>, transform_indices = @transform_13, window_bounds = array<i64: 32, 128>}, {pipeline_mode = #tpu.pipeline_mode<synchronous>, transform_indices = @transform_14, window_bounds = array<i64: 1, 128>}, {transform_indices = @transform_15, window_bounds = array<i64: 1, 16, 128>}, {transform_indices = @transform_16, window_bounds = array<i64: 1, 24, 24>}]} {
    %c0 = arith.constant 0 : index
    %c0_0 = arith.constant 0 : index
    %c0_1 = arith.constant 0 : index
    %0 = vector.load %arg1[%c0, %c0_0, %c0_1] : memref<1x24x64xf32, #tpu.memory_space<vmem>>, vector<1x24x64xf32>
    %1 = vector.shape_cast %0 : vector<1x24x64xf32> to vector<24x64xf32>
    %c0_2 = arith.constant 0 : index
    %c0_3 = arith.constant 0 : index
    %2 = vector.load %arg4[%c0_2, %c0_3] : memref<64x32xf32, #tpu.memory_space<vmem>>, vector<64x32xf32>
    %cst = arith.constant dense<0.000000e+00> : vector<24x32xf32>
    %3 = tpu.matmul %1, %2, %cst {dimension_numbers = #tpu.dot_dimension_numbers<[1], [0], [0], [1], [0, 0, 1, 1], [], []>} : vector<24x64xf32>, vector<64x32xf32>, vector<24x32xf32> -> vector<24x32xf32>
    %c0_4 = arith.constant 0 : index
    %c0_5 = arith.constant 0 : index
    %4 = vector.load %arg5[%c0_4, %c0_5] : memref<1x32xf32, #tpu.memory_space<vmem>>, vector<1x32xf32>
    %5 = vector.broadcast %4 : vector<1x32xf32> to vector<24x32xf32>
    %6 = arith.addf %3, %5 : vector<24x32xf32>
    %c0_6 = arith.constant 0 : index
    %c0_7 = arith.constant 0 : index
    %7 = vector.load %arg6[%c0_6, %c0_7] : memref<1x32xf32, #tpu.memory_space<vmem>>, vector<1x32xf32>
    %c0_8 = arith.constant 0 : index
    %c0_9 = arith.constant 0 : index
    %8 = vector.load %arg7[%c0_8, %c0_9] : memref<1x32xf32, #tpu.memory_space<vmem>>, vector<1x32xf32>
    %cst_10 = arith.constant dense<0.000000e+00> : vector<24xf32>
    %9 = vector.multi_reduction <add>, %6, %cst_10 [1] : vector<24x32xf32> to vector<24xf32>
    %10 = vector.shape_cast %9 : vector<24xf32> to vector<24x1xf32>
    %cst_11 = arith.constant 3.200000e+01 : f32
    %11 = vector.broadcast %cst_11 : f32 to vector<24x1xf32>
    %12 = arith.divf %10, %11 : vector<24x1xf32>
    %13 = vector.broadcast %12 : vector<24x1xf32> to vector<24x32xf32>
    %14 = arith.subf %6, %13 : vector<24x32xf32>
    %15 = arith.mulf %14, %14 : vector<24x32xf32>
    %cst_12 = arith.constant dense<0.000000e+00> : vector<24xf32>
    %16 = vector.multi_reduction <add>, %15, %cst_12 [1] : vector<24x32xf32> to vector<24xf32>
    %17 = vector.shape_cast %16 : vector<24xf32> to vector<24x1xf32>
    %cst_13 = arith.constant 3.200000e+01 : f32
    %18 = vector.broadcast %cst_13 : f32 to vector<24x1xf32>
    %19 = arith.divf %17, %18 : vector<24x1xf32>
    %20 = vector.broadcast %12 : vector<24x1xf32> to vector<24x32xf32>
    %21 = arith.subf %6, %20 : vector<24x32xf32>
    %cst_14 = arith.constant 9.99999974E-6 : f32
    %22 = vector.broadcast %cst_14 : f32 to vector<24x1xf32>
    %23 = arith.addf %19, %22 : vector<24x1xf32>
    %24 = math.rsqrt %23 : vector<24x1xf32>
    %25 = vector.broadcast %24 : vector<24x1xf32> to vector<24x32xf32>
    %26 = arith.mulf %21, %25 : vector<24x32xf32>
    %27 = vector.broadcast %7 : vector<1x32xf32> to vector<24x32xf32>
    %28 = arith.mulf %26, %27 : vector<24x32xf32>
    %29 = vector.broadcast %8 : vector<1x32xf32> to vector<24x32xf32>
    %30 = arith.addf %28, %29 : vector<24x32xf32>
    %cst_15 = arith.constant 0.000000e+00 : f32
    %31 = vector.broadcast %cst_15 : f32 to vector<24x32xf32>
    %32 = arith.maximumf %30, %31 : vector<24x32xf32>
    %33 = tpu.iota {dimensions = array<i32: 0>} : vector<24x1xi32>
    %34 = tpu.iota {dimensions = array<i32: 1>} : vector<1x24xi32>
    %c8_i32 = arith.constant 8 : i32
    %c0_i32 = arith.constant 0 : i32
    %35 = arith.cmpi eq, %c8_i32, %c0_i32 : i32
    %c1_i32 = arith.constant 1 : i32
    %36 = arith.select %35, %c1_i32, %c8_i32 : i32
    %37 = vector.broadcast %36 : i32 to vector<24x1xi32>
    %38 = arith.remsi %33, %37 : vector<24x1xi32>
    %c0_i32_16 = arith.constant 0 : i32
    %39 = vector.broadcast %c0_i32_16 : i32 to vector<24x1xi32>
    %40 = arith.cmpi ne, %38, %39 : vector<24x1xi32>
    %c0_i32_17 = arith.constant 0 : i32
    %41 = vector.broadcast %c0_i32_17 : i32 to vector<24x1xi32>
    %42 = arith.cmpi slt, %38, %41 : vector<24x1xi32>
    %c0_i32_18 = arith.constant 0 : i32
    %43 = arith.cmpi slt, %36, %c0_i32_18 : i32
    %44 = vector.broadcast %43 : i1 to vector<24x1xi1>
    %45 = vector.broadcast %44 : vector<24x1xi1> to vector<24x1xi1>
    %46 = arith.xori %42, %45 : vector<24x1xi1>
    %47 = arith.andi %46, %40 : vector<24x1xi1>
    %48 = vector.broadcast %36 : i32 to vector<24x1xi32>
    %49 = arith.addi %38, %48 : vector<24x1xi32>
    %50 = arith.select %47, %49, %38 : vector<24x1xi1>, vector<24x1xi32>
    %c6_i32 = arith.constant 6 : i32
    %51 = vector.broadcast %c6_i32 : i32 to vector<24x1xi32>
    %52 = arith.cmpi slt, %50, %51 : vector<24x1xi32>
    %c8_i32_19 = arith.constant 8 : i32
    %c0_i32_20 = arith.constant 0 : i32
    %53 = arith.cmpi eq, %c8_i32_19, %c0_i32_20 : i32
    %c1_i32_21 = arith.constant 1 : i32
    %54 = arith.select %53, %c1_i32_21, %c8_i32_19 : i32
    %55 = vector.broadcast %54 : i32 to vector<1x24xi32>
    %56 = arith.remsi %34, %55 : vector<1x24xi32>
    %c0_i32_22 = arith.constant 0 : i32
    %57 = vector.broadcast %c0_i32_22 : i32 to vector<1x24xi32>
    %58 = arith.cmpi ne, %56, %57 : vector<1x24xi32>
    %c0_i32_23 = arith.constant 0 : i32
    %59 = vector.broadcast %c0_i32_23 : i32 to vector<1x24xi32>
    %60 = arith.cmpi slt, %56, %59 : vector<1x24xi32>
    %c0_i32_24 = arith.constant 0 : i32
    %61 = arith.cmpi slt, %54, %c0_i32_24 : i32
    %62 = vector.broadcast %61 : i1 to vector<1x24xi1>
    %63 = vector.broadcast %62 : vector<1x24xi1> to vector<1x24xi1>
    %64 = arith.xori %60, %63 : vector<1x24xi1>
    %65 = arith.andi %64, %58 : vector<1x24xi1>
    %66 = vector.broadcast %54 : i32 to vector<1x24xi32>
    %67 = arith.addi %56, %66 : vector<1x24xi32>
    %68 = arith.select %65, %67, %56 : vector<1x24xi1>, vector<1x24xi32>
    %c6_i32_25 = arith.constant 6 : i32
    %69 = vector.broadcast %c6_i32_25 : i32 to vector<1x24xi32>
    %70 = arith.cmpi slt, %68, %69 : vector<1x24xi32>
    %cst_26 = arith.constant 0.000000e+00 : f32
    %71 = vector.shape_cast %52 : vector<24x1xi1> to vector<24x1xi1>
    %72 = vector.broadcast %71 : vector<24x1xi1> to vector<24x32xi1>
    %73 = vector.broadcast %cst_26 : f32 to vector<24x32xf32>
    %74 = arith.select %72, %32, %73 : vector<24x32xi1>, vector<24x32xf32>
    %c0_27 = arith.constant 0 : index
    %c0_28 = arith.constant 0 : index
    %c0_29 = arith.constant 0 : index
    %75 = vector.load %arg2[%c0_27, %c0_28, %c0_29] : memref<1x24x2xf32, #tpu.memory_space<vmem>>, vector<1x24x2xf32>
    %76 = vector.shape_cast %75 : vector<1x24x2xf32> to vector<24x2xf32>
    %c0_30 = arith.constant 0 : index
    %c0_31 = arith.constant 0 : index
    %c0_32 = arith.constant 0 : index
    %77 = vector.load %arg3[%c0_30, %c0_31, %c0_32] : memref<1x2x24xf32, #tpu.memory_space<vmem>>, vector<1x2x24xf32>
    %78 = vector.shape_cast %77 : vector<1x2x24xf32> to vector<2x24xf32>
    %79 = vector.extract_strided_slice %76 {offsets = [0, 0], sizes = [24, 1], strides = [1, 1]} : vector<24x2xf32> to vector<24x1xf32>
    %80 = vector.extract_strided_slice %78 {offsets = [0, 0], sizes = [1, 24], strides = [1, 1]} : vector<2x24xf32> to vector<1x24xf32>
    %81 = vector.broadcast %79 : vector<24x1xf32> to vector<24x24xf32>
    %82 = vector.broadcast %80 : vector<1x24xf32> to vector<24x24xf32>
    %83 = arith.subf %81, %82 : vector<24x24xf32>
    %84 = vector.extract_strided_slice %76 {offsets = [0, 1], sizes = [24, 1], strides = [1, 1]} : vector<24x2xf32> to vector<24x1xf32>
    %85 = vector.extract_strided_slice %78 {offsets = [1, 0], sizes = [1, 24], strides = [1, 1]} : vector<2x24xf32> to vector<1x24xf32>
    %86 = vector.broadcast %84 : vector<24x1xf32> to vector<24x24xf32>
    %87 = vector.broadcast %85 : vector<1x24xf32> to vector<24x24xf32>
    %88 = arith.subf %86, %87 : vector<24x24xf32>
    %89 = arith.mulf %83, %83 : vector<24x24xf32>
    %90 = arith.mulf %88, %88 : vector<24x24xf32>
    %91 = arith.addf %89, %90 : vector<24x24xf32>
    %cst_33 = arith.constant 2.560000e+00 : f32
    %92 = vector.broadcast %cst_33 : f32 to vector<24x24xf32>
    %93 = arith.cmpf ogt, %91, %92 : vector<24x24xf32>
    %cst_34 = arith.constant dense<true> : vector<1x24xi1>
    %94 = arith.xori %70, %cst_34 : vector<1x24xi1>
    %95 = vector.broadcast %94 : vector<1x24xi1> to vector<24x24xi1>
    %96 = arith.ori %93, %95 : vector<24x24xi1>
    %c0_35 = arith.constant 0 : index
    %c0_36 = arith.constant 0 : index
    %97 = vector.load %arg8[%c0_35, %c0_36] : memref<32x128xf32, #tpu.memory_space<vmem>>, vector<32x128xf32>
    %cst_37 = arith.constant dense<0.000000e+00> : vector<24x128xf32>
    %98 = tpu.matmul %74, %97, %cst_37 {dimension_numbers = #tpu.dot_dimension_numbers<[1], [0], [0], [1], [0, 0, 1, 1], [], []>} : vector<24x32xf32>, vector<32x128xf32>, vector<24x128xf32> -> vector<24x128xf32>
    %c0_38 = arith.constant 0 : index
    %c0_39 = arith.constant 0 : index
    %99 = vector.load %arg9[%c0_38, %c0_39] : memref<1x128xf32, #tpu.memory_space<vmem>>, vector<1x128xf32>
    %100 = vector.broadcast %99 : vector<1x128xf32> to vector<24x128xf32>
    %101 = arith.addf %98, %100 : vector<24x128xf32>
    %102 = vector.extract_strided_slice %101 {offsets = [0, 0], sizes = [24, 32], strides = [1, 1]} : vector<24x128xf32> to vector<24x32xf32>
    %103 = vector.extract_strided_slice %101 {offsets = [0, 32], sizes = [24, 32], strides = [1, 1]} : vector<24x128xf32> to vector<24x32xf32>
    %cst_40 = arith.constant dense<0.000000e+00> : vector<24x24xf32>
    %104 = tpu.matmul %102, %103, %cst_40 {dimension_numbers = #tpu.dot_dimension_numbers<[1], [1], [0], [0], [0, 0, 1, 0], [], []>} : vector<24x32xf32>, vector<24x32xf32>, vector<24x24xf32> -> vector<24x24xf32>
    %cst_41 = arith.constant 0.176776692 : f32
    %105 = vector.broadcast %cst_41 : f32 to vector<24x24xf32>
    %106 = arith.mulf %104, %105 : vector<24x24xf32>
    %cst_42 = arith.constant -1.000000e+30 : f32
    %107 = vector.broadcast %cst_42 : f32 to vector<24x24xf32>
    %108 = arith.select %96, %107, %106 : vector<24x24xi1>, vector<24x24xf32>
    %cst_43 = arith.constant dense<0xFF800000> : vector<24xf32>
    %109 = vector.multi_reduction <maximumf>, %108, %cst_43 [1] : vector<24x24xf32> to vector<24xf32>
    %110 = vector.shape_cast %109 : vector<24xf32> to vector<24x1xf32>
    %111 = vector.broadcast %110 : vector<24x1xf32> to vector<24x24xf32>
    %112 = arith.subf %108, %111 : vector<24x24xf32>
    %113 = math.exp %112 : vector<24x24xf32>
    %cst_44 = arith.constant dense<0.000000e+00> : vector<24xf32>
    %114 = vector.multi_reduction <add>, %113, %cst_44 [1] : vector<24x24xf32> to vector<24xf32>
    %115 = vector.shape_cast %114 : vector<24xf32> to vector<24x1xf32>
    %116 = tpu.reciprocal %115 {approx = true} : vector<24x1xf32> -> vector<24x1xf32>
    %117 = arith.mulf %115, %116 : vector<24x1xf32>
    %cst_45 = arith.constant 2.000000e+00 : f32
    %118 = vector.broadcast %cst_45 : f32 to vector<24x1xf32>
    %119 = arith.subf %118, %117 : vector<24x1xf32>
    %120 = arith.mulf %116, %119 : vector<24x1xf32>
    %121 = vector.broadcast %120 : vector<24x1xf32> to vector<24x24xf32>
    %122 = arith.mulf %113, %121 : vector<24x24xf32>
    %cst_46 = arith.constant dense<0.000000e+00> : vector<24x32xf32>
    %123 = tpu.matmul %122, %74, %cst_46 {dimension_numbers = #tpu.dot_dimension_numbers<[1], [0], [0], [1], [0, 0, 1, 1], [], []>} : vector<24x24xf32>, vector<24x32xf32>, vector<24x32xf32> -> vector<24x32xf32>
    %124 = vector.extract_strided_slice %101 {offsets = [0, 64], sizes = [24, 32], strides = [1, 1]} : vector<24x128xf32> to vector<24x32xf32>
    %125 = vector.extract_strided_slice %101 {offsets = [0, 96], sizes = [24, 32], strides = [1, 1]} : vector<24x128xf32> to vector<24x32xf32>
    %cst_47 = arith.constant dense<0.000000e+00> : vector<24x24xf32>
    %126 = tpu.matmul %124, %125, %cst_47 {dimension_numbers = #tpu.dot_dimension_numbers<[1], [1], [0], [0], [0, 0, 1, 0], [], []>} : vector<24x32xf32>, vector<24x32xf32>, vector<24x24xf32> -> vector<24x24xf32>
    %cst_48 = arith.constant 0.176776692 : f32
    %127 = vector.broadcast %cst_48 : f32 to vector<24x24xf32>
    %128 = arith.mulf %126, %127 : vector<24x24xf32>
    %cst_49 = arith.constant -1.000000e+30 : f32
    %129 = vector.broadcast %cst_49 : f32 to vector<24x24xf32>
    %130 = arith.select %96, %129, %128 : vector<24x24xi1>, vector<24x24xf32>
    %cst_50 = arith.constant dense<0xFF800000> : vector<24xf32>
    %131 = vector.multi_reduction <maximumf>, %130, %cst_50 [1] : vector<24x24xf32> to vector<24xf32>
    %132 = vector.shape_cast %131 : vector<24xf32> to vector<24x1xf32>
    %133 = vector.broadcast %132 : vector<24x1xf32> to vector<24x24xf32>
    %134 = arith.subf %130, %133 : vector<24x24xf32>
    %135 = math.exp %134 : vector<24x24xf32>
    %cst_51 = arith.constant dense<0.000000e+00> : vector<24xf32>
    %136 = vector.multi_reduction <add>, %135, %cst_51 [1] : vector<24x24xf32> to vector<24xf32>
    %137 = vector.shape_cast %136 : vector<24xf32> to vector<24x1xf32>
    %138 = tpu.reciprocal %137 {approx = true} : vector<24x1xf32> -> vector<24x1xf32>
    %139 = arith.mulf %137, %138 : vector<24x1xf32>
    %cst_52 = arith.constant 2.000000e+00 : f32
    %140 = vector.broadcast %cst_52 : f32 to vector<24x1xf32>
    %141 = arith.subf %140, %139 : vector<24x1xf32>
    %142 = arith.mulf %138, %141 : vector<24x1xf32>
    %143 = vector.broadcast %142 : vector<24x1xf32> to vector<24x24xf32>
    %144 = arith.mulf %135, %143 : vector<24x24xf32>
    %cst_53 = arith.constant dense<0.000000e+00> : vector<24x32xf32>
    %145 = tpu.matmul %144, %74, %cst_53 {dimension_numbers = #tpu.dot_dimension_numbers<[1], [0], [0], [1], [0, 0, 1, 1], [], []>} : vector<24x24xf32>, vector<24x32xf32>, vector<24x32xf32> -> vector<24x32xf32>
    %c0_54 = arith.constant 0 : index
    %c0_55 = arith.constant 0 : index
    %c0_56 = arith.constant 0 : index
    %146 = vector.load %arg17[%c0_54, %c0_55, %c0_56] : memref<1x24x24xf32, #tpu.memory_space<vmem>>, vector<1x24x24xf32>
    %147 = vector.shape_cast %146 : vector<1x24x24xf32> to vector<24x24xf32>
    %148 = vector.shape_cast %144 : vector<24x24xf32> to vector<1x24x24xf32>
    tpu.vector_store %arg17[%c0_54, %c0_55, %c0_56], %148 {strides = array<i32>} : memref<1x24x24xf32, #tpu.memory_space<vmem>>, vector<1x24x24xf32>,
    %149 = tpu.concatenate %123, %145 in 1 : vector<24x32xf32>, vector<24x32xf32> -> vector<24x64xf32>
    %c0_57 = arith.constant 0 : index
    %c0_58 = arith.constant 0 : index
    %150 = vector.load %arg10[%c0_57, %c0_58] : memref<64x64xf32, #tpu.memory_space<vmem>>, vector<64x64xf32>
    %cst_59 = arith.constant dense<0.000000e+00> : vector<24x64xf32>
    %151 = tpu.matmul %149, %150, %cst_59 {dimension_numbers = #tpu.dot_dimension_numbers<[1], [0], [0], [1], [0, 0, 1, 1], [], []>} : vector<24x64xf32>, vector<64x64xf32>, vector<24x64xf32> -> vector<24x64xf32>
    %c0_60 = arith.constant 0 : index
    %c0_61 = arith.constant 0 : index
    %152 = vector.load %arg11[%c0_60, %c0_61] : memref<1x64xf32, #tpu.memory_space<vmem>>, vector<1x64xf32>
    %c0_62 = arith.constant 0 : index
    %c0_63 = arith.constant 0 : index
    %153 = vector.load %arg12[%c0_62, %c0_63] : memref<1x64xf32, #tpu.memory_space<vmem>>, vector<1x64xf32>
    %cst_64 = arith.constant 0.000000e+00 : f32
    %154 = vector.broadcast %cst_64 : f32 to vector<24x32xf32>
    %155 = vector.extract_strided_slice %151 {offsets = [0, 0], sizes = [24, 32], strides = [1, 1]} : vector<24x64xf32> to vector<24x32xf32>
    %156 = vector.extract_strided_slice %152 {offsets = [0, 0], sizes = [1, 32], strides = [1, 1]} : vector<1x64xf32> to vector<1x32xf32>
    %157 = vector.extract_strided_slice %153 {offsets = [0, 0], sizes = [1, 32], strides = [1, 1]} : vector<1x64xf32> to vector<1x32xf32>
    %cst_65 = arith.constant dense<0.000000e+00> : vector<24xf32>
    %158 = vector.multi_reduction <add>, %155, %cst_65 [1] : vector<24x32xf32> to vector<24xf32>
    %159 = vector.shape_cast %158 : vector<24xf32> to vector<24x1xf32>
    %cst_66 = arith.constant 3.200000e+01 : f32
    %160 = vector.broadcast %cst_66 : f32 to vector<24x1xf32>
    %161 = arith.divf %159, %160 : vector<24x1xf32>
    %162 = vector.broadcast %161 : vector<24x1xf32> to vector<24x32xf32>
    %163 = arith.subf %155, %162 : vector<24x32xf32>
    %164 = arith.mulf %163, %163 : vector<24x32xf32>
    %cst_67 = arith.constant dense<0.000000e+00> : vector<24xf32>
    %165 = vector.multi_reduction <add>, %164, %cst_67 [1] : vector<24x32xf32> to vector<24xf32>
    %166 = vector.shape_cast %165 : vector<24xf32> to vector<24x1xf32>
    %cst_68 = arith.constant 3.200000e+01 : f32
    %167 = vector.broadcast %cst_68 : f32 to vector<24x1xf32>
    %168 = arith.divf %166, %167 : vector<24x1xf32>
    %169 = vector.broadcast %161 : vector<24x1xf32> to vector<24x32xf32>
    %170 = arith.subf %155, %169 : vector<24x32xf32>
    %cst_69 = arith.constant 9.99999974E-6 : f32
    %171 = vector.broadcast %cst_69 : f32 to vector<24x1xf32>
    %172 = arith.addf %168, %171 : vector<24x1xf32>
    %173 = math.rsqrt %172 : vector<24x1xf32>
    %174 = vector.broadcast %173 : vector<24x1xf32> to vector<24x32xf32>
    %175 = arith.mulf %170, %174 : vector<24x32xf32>
    %176 = vector.broadcast %156 : vector<1x32xf32> to vector<24x32xf32>
    %177 = arith.mulf %175, %176 : vector<24x32xf32>
    %178 = vector.broadcast %157 : vector<1x32xf32> to vector<24x32xf32>
    %179 = arith.addf %177, %178 : vector<24x32xf32>
    %cst_70 = arith.constant 0.000000e+00 : f32
    %180 = vector.broadcast %cst_70 : f32 to vector<24x32xf32>
    %181 = arith.maximumf %179, %180 : vector<24x32xf32>
    %182 = arith.addf %154, %181 : vector<24x32xf32>
    %183 = vector.extract_strided_slice %151 {offsets = [0, 32], sizes = [24, 32], strides = [1, 1]} : vector<24x64xf32> to vector<24x32xf32>
    %184 = vector.extract_strided_slice %152 {offsets = [0, 32], sizes = [1, 32], strides = [1, 1]} : vector<1x64xf32> to vector<1x32xf32>
    %185 = vector.extract_strided_slice %153 {offsets = [0, 32], sizes = [1, 32], strides = [1, 1]} : vector<1x64xf32> to vector<1x32xf32>
    %cst_71 = arith.constant dense<0.000000e+00> : vector<24xf32>
    %186 = vector.multi_reduction <add>, %183, %cst_71 [1] : vector<24x32xf32> to vector<24xf32>
    %187 = vector.shape_cast %186 : vector<24xf32> to vector<24x1xf32>
    %cst_72 = arith.constant 3.200000e+01 : f32
    %188 = vector.broadcast %cst_72 : f32 to vector<24x1xf32>
    %189 = arith.divf %187, %188 : vector<24x1xf32>
    %190 = vector.broadcast %189 : vector<24x1xf32> to vector<24x32xf32>
    %191 = arith.subf %183, %190 : vector<24x32xf32>
    %192 = arith.mulf %191, %191 : vector<24x32xf32>
    %cst_73 = arith.constant dense<0.000000e+00> : vector<24xf32>
    %193 = vector.multi_reduction <add>, %192, %cst_73 [1] : vector<24x32xf32> to vector<24xf32>
    %194 = vector.shape_cast %193 : vector<24xf32> to vector<24x1xf32>
    %cst_74 = arith.constant 3.200000e+01 : f32
    %195 = vector.broadcast %cst_74 : f32 to vector<24x1xf32>
    %196 = arith.divf %194, %195 : vector<24x1xf32>
    %197 = vector.broadcast %189 : vector<24x1xf32> to vector<24x32xf32>
    %198 = arith.subf %183, %197 : vector<24x32xf32>
    %cst_75 = arith.constant 9.99999974E-6 : f32
    %199 = vector.broadcast %cst_75 : f32 to vector<24x1xf32>
    %200 = arith.addf %196, %199 : vector<24x1xf32>
    %201 = math.rsqrt %200 : vector<24x1xf32>
    %202 = vector.broadcast %201 : vector<24x1xf32> to vector<24x32xf32>
    %203 = arith.mulf %198, %202 : vector<24x32xf32>
    %204 = vector.broadcast %184 : vector<1x32xf32> to vector<24x32xf32>
    %205 = arith.mulf %203, %204 : vector<24x32xf32>
    %206 = vector.broadcast %185 : vector<1x32xf32> to vector<24x32xf32>
    %207 = arith.addf %205, %206 : vector<24x32xf32>
    %cst_76 = arith.constant 0.000000e+00 : f32
    %208 = vector.broadcast %cst_76 : f32 to vector<24x32xf32>
    %209 = arith.maximumf %207, %208 : vector<24x32xf32>
    %210 = arith.addf %182, %209 : vector<24x32xf32>
    %211 = arith.addf %210, %74 : vector<24x32xf32>
    %c0_77 = arith.constant 0 : index
    %c0_78 = arith.constant 0 : index
    %212 = vector.load %arg13[%c0_77, %c0_78] : memref<8x24xf32, #tpu.memory_space<vmem>>, vector<8x24xf32>
    %cst_79 = arith.constant dense<0.000000e+00> : vector<8x32xf32>
    %213 = tpu.matmul %212, %211, %cst_79 {dimension_numbers = #tpu.dot_dimension_numbers<[1], [0], [0], [1], [0, 0, 1, 1], [], []>} : vector<8x24xf32>, vector<24x32xf32>, vector<8x32xf32> -> vector<8x32xf32>
    %cst_80 = arith.constant -1.000000e+30 : f32
    %214 = vector.shape_cast %52 : vector<24x1xi1> to vector<24x1xi1>
    %215 = vector.broadcast %214 : vector<24x1xi1> to vector<24x32xi1>
    %216 = vector.broadcast %cst_80 : f32 to vector<24x32xf32>
    %217 = arith.select %215, %211, %216 : vector<24x32xi1>, vector<24x32xf32>
    %218 = vector.extract_strided_slice %217 {offsets = [0, 0], sizes = [8, 32], strides = [1, 1]} : vector<24x32xf32> to vector<8x32xf32>
    %cst_81 = arith.constant dense<0xFF800000> : vector<32xf32>
    %219 = vector.multi_reduction <maximumf>, %218, %cst_81 [0] : vector<8x32xf32> to vector<32xf32>
    %220 = vector.shape_cast %219 : vector<32xf32> to vector<1x32xf32>
    %221 = vector.extract_strided_slice %217 {offsets = [8, 0], sizes = [8, 32], strides = [1, 1]} : vector<24x32xf32> to vector<8x32xf32>
    %cst_82 = arith.constant dense<0xFF800000> : vector<32xf32>
    %222 = vector.multi_reduction <maximumf>, %221, %cst_82 [0] : vector<8x32xf32> to vector<32xf32>
    %223 = vector.shape_cast %222 : vector<32xf32> to vector<1x32xf32>
    %224 = arith.addf %220, %223 : vector<1x32xf32>
    %225 = vector.extract_strided_slice %217 {offsets = [16, 0], sizes = [8, 32], strides = [1, 1]} : vector<24x32xf32> to vector<8x32xf32>
    %cst_83 = arith.constant dense<0xFF800000> : vector<32xf32>
    %226 = vector.multi_reduction <maximumf>, %225, %cst_83 [0] : vector<8x32xf32> to vector<32xf32>
    %227 = vector.shape_cast %226 : vector<32xf32> to vector<1x32xf32>
    %228 = arith.addf %224, %227 : vector<1x32xf32>
    %cst_84 = arith.constant 0.333333343 : f32
    %229 = vector.broadcast %cst_84 : f32 to vector<1x32xf32>
    %230 = arith.mulf %228, %229 : vector<1x32xf32>
    %231 = vector.shape_cast %230 : vector<1x32xf32> to vector<1x32xf32>
    %232 = vector.broadcast %231 : vector<1x32xf32> to vector<8x32xf32>
    %233 = tpu.concatenate %213, %232 in 0 : vector<8x32xf32>, vector<8x32xf32> -> vector<16x32xf32>
    %c0_85 = arith.constant 0 : index
    %c0_86 = arith.constant 0 : index
    %234 = vector.load %arg14[%c0_85, %c0_86] : memref<32x128xf32, #tpu.memory_space<vmem>>, vector<32x128xf32>
    %cst_87 = arith.constant dense<0.000000e+00> : vector<16x128xf32>
    %235 = tpu.matmul %233, %234, %cst_87 {dimension_numbers = #tpu.dot_dimension_numbers<[1], [0], [0], [1], [0, 0, 1, 1], [], []>} : vector<16x32xf32>, vector<32x128xf32>, vector<16x128xf32> -> vector<16x128xf32>
    %c0_88 = arith.constant 0 : index
    %c0_89 = arith.constant 0 : index
    %236 = vector.load %arg15[%c0_88, %c0_89] : memref<1x128xf32, #tpu.memory_space<vmem>>, vector<1x128xf32>
    %237 = vector.broadcast %236 : vector<1x128xf32> to vector<16x128xf32>
    %238 = arith.addf %235, %237 : vector<16x128xf32>
    %c0_90 = arith.constant 0 : index
    %c0_91 = arith.constant 0 : index
    %c0_92 = arith.constant 0 : index
    %239 = vector.load %arg16[%c0_90, %c0_91, %c0_92] : memref<1x16x128xf32, #tpu.memory_space<vmem>>, vector<1x16x128xf32>
    %240 = vector.shape_cast %239 : vector<1x16x128xf32> to vector<16x128xf32>
    %241 = vector.shape_cast %238 : vector<16x128xf32> to vector<1x16x128xf32>
    tpu.vector_store %arg16[%c0_90, %c0_91, %c0_92], %241 {strides = array<i32>} : memref<1x16x128xf32, #tpu.memory_space<vmem>>, vector<1x16x128xf32>,
    return
  }
  func.func @transform_0(%arg0: i32) -> (i32, i32, i32) {
    %c0_i32 = arith.constant 0 : i32
    %c0_i32_0 = arith.constant 0 : i32
    %c0_i32_1 = arith.constant 0 : i32
    return %arg0, %c0_i32, %c0_i32_0 : i32, i32, i32
  }
  func.func @transform_1(%arg0: i32) -> (i32, i32, i32) {
    %c0_i32 = arith.constant 0 : i32
    %c0_i32_0 = arith.constant 0 : i32
    %c0_i32_1 = arith.constant 0 : i32
    return %arg0, %c0_i32, %c0_i32_0 : i32, i32, i32
  }
  func.func @transform_2(%arg0: i32) -> (i32, i32, i32) {
    %c0_i32 = arith.constant 0 : i32
    %c0_i32_0 = arith.constant 0 : i32
    %c0_i32_1 = arith.constant 0 : i32
    return %arg0, %c0_i32, %c0_i32_0 : i32, i32, i32
  }
  func.func @transform_3(%arg0: i32) -> (i32, i32) {
    %c0_i32 = arith.constant 0 : i32
    %c0_i32_0 = arith.constant 0 : i32
    %c0_i32_1 = arith.constant 0 : i32
    return %c0_i32, %c0_i32_0 : i32, i32
  }
  func.func @transform_4(%arg0: i32) -> (i32, i32) {
    %c0_i32 = arith.constant 0 : i32
    %c0_i32_0 = arith.constant 0 : i32
    %c0_i32_1 = arith.constant 0 : i32
    return %c0_i32, %c0_i32_0 : i32, i32
  }
  func.func @transform_5(%arg0: i32) -> (i32, i32) {
    %c0_i32 = arith.constant 0 : i32
    %c0_i32_0 = arith.constant 0 : i32
    %c0_i32_1 = arith.constant 0 : i32
    return %c0_i32, %c0_i32_0 : i32, i32
  }
  func.func @transform_6(%arg0: i32) -> (i32, i32) {
    %c0_i32 = arith.constant 0 : i32
    %c0_i32_0 = arith.constant 0 : i32
    %c0_i32_1 = arith.constant 0 : i32
    return %c0_i32, %c0_i32_0 : i32, i32
  }
  func.func @transform_7(%arg0: i32) -> (i32, i32) {
    %c0_i32 = arith.constant 0 : i32
    %c0_i32_0 = arith.constant 0 : i32
    %c0_i32_1 = arith.constant 0 : i32
    return %c0_i32, %c0_i32_0 : i32, i32
  }
  func.func @transform_8(%arg0: i32) -> (i32, i32) {
    %c0_i32 = arith.constant 0 : i32
    %c0_i32_0 = arith.constant 0 : i32
    %c0_i32_1 = arith.constant 0 : i32
    return %c0_i32, %c0_i32_0 : i32, i32
  }
  func.func @transform_9(%arg0: i32) -> (i32, i32) {
    %c0_i32 = arith.constant 0 : i32
    %c0_i32_0 = arith.constant 0 : i32
    %c0_i32_1 = arith.constant 0 : i32
    return %c0_i32, %c0_i32_0 : i32, i32
  }
  func.func @transform_10(%arg0: i32) -> (i32, i32) {
    %c0_i32 = arith.constant 0 : i32
    %c0_i32_0 = arith.constant 0 : i32
    %c0_i32_1 = arith.constant 0 : i32
    return %c0_i32, %c0_i32_0 : i32, i32
  }
  func.func @transform_11(%arg0: i32) -> (i32, i32) {
    %c0_i32 = arith.constant 0 : i32
    %c0_i32_0 = arith.constant 0 : i32
    %c0_i32_1 = arith.constant 0 : i32
    return %c0_i32, %c0_i32_0 : i32, i32
  }
  func.func @transform_12(%arg0: i32) -> (i32, i32) {
    %c0_i32 = arith.constant 0 : i32
    %c0_i32_0 = arith.constant 0 : i32
    %c0_i32_1 = arith.constant 0 : i32
    return %c0_i32, %c0_i32_0 : i32, i32
  }
  func.func @transform_13(%arg0: i32) -> (i32, i32) {
    %c0_i32 = arith.constant 0 : i32
    %c0_i32_0 = arith.constant 0 : i32
    %c0_i32_1 = arith.constant 0 : i32
    return %c0_i32, %c0_i32_0 : i32, i32
  }
  func.func @transform_14(%arg0: i32) -> (i32, i32) {
    %c0_i32 = arith.constant 0 : i32
    %c0_i32_0 = arith.constant 0 : i32
    %c0_i32_1 = arith.constant 0 : i32
    return %c0_i32, %c0_i32_0 : i32, i32
  }
  func.func @transform_15(%arg0: i32) -> (i32, i32, i32) {
    %c0_i32 = arith.constant 0 : i32
    %c0_i32_0 = arith.constant 0 : i32
    %c0_i32_1 = arith.constant 0 : i32
    return %arg0, %c0_i32, %c0_i32_0 : i32, i32, i32
  }
  func.func @transform_16(%arg0: i32) -> (i32, i32, i32) {
    %c0_i32 = arith.constant 0 : i32
    %c0_i32_0 = arith.constant 0 : i32
    %c0_i32_1 = arith.constant 0 : i32
    return %arg0, %c0_i32, %c0_i32_0 : i32, i32, i32
  }
}

</mosaic_0001>

<llo_original>
// kernel: gcnnet_collective_forward.1
$region0: #{gcnnet_collective_forward.1}
  #allocation0 [shape = 'u32[]', space=smem, size = 0x4, offset = 0x4, fixed_abs, tag = 'smem constant byte address 0x4 - core index']
  #allocation1 [shape = 'u32[144,128]{1,0:T(1,128)}', space=vmem, size = 0x12000, scoped, tag = 'internal scratch']
  %s0 = inlined_call_operand.vmem [shape: f32[2,24,64], index: 0, kind: input, shape index: {}]
  %s1 = inlined_call_operand.vmem [shape: f32[2,24,2], index: 1, kind: input, shape index: {}]
  %s2 = inlined_call_operand.vmem [shape: f32[2,2,24], index: 2, kind: input, shape index: {}]
  %s3 = inlined_call_operand.vmem [shape: f32[64,32], index: 3, kind: input, shape index: {}]
  %s4 = inlined_call_operand.vmem [shape: f32[1,32], index: 4, kind: input, shape index: {}]
  %s5 = inlined_call_operand.vmem [shape: f32[1,32], index: 5, kind: input, shape index: {}]
  %s6 = inlined_call_operand.vmem [shape: f32[1,32], index: 6, kind: input, shape index: {}]
  %s7 = inlined_call_operand.vmem [shape: f32[32,128], index: 7, kind: input, shape index: {}]
  %s8 = inlined_call_operand.vmem [shape: f32[1,128], index: 8, kind: input, shape index: {}]
  %s9 = inlined_call_operand.vmem [shape: f32[64,64], index: 9, kind: input, shape index: {}]
  %s10 = inlined_call_operand.vmem [shape: f32[1,64], index: 10, kind: input, shape index: {}]
  %s11 = inlined_call_operand.vmem [shape: f32[1,64], index: 11, kind: input, shape index: {}]
  %s12 = inlined_call_operand.vmem [shape: f32[8,24], index: 12, kind: input, shape index: {}]
  %s13 = inlined_call_operand.vmem [shape: f32[32,128], index: 13, kind: input, shape index: {}]
  %s14 = inlined_call_operand.vmem [shape: f32[1,128], index: 14, kind: input, shape index: {}]
  %s15 = inlined_call_operand.vmem [shape: f32[2,16,128], index: 15, kind: output, shape index: {0}]
  %s16 = inlined_call_operand.vmem [shape: f32[2,24,24], index: 16, kind: output, shape index: {1}]
  %17 = xla_tuple %s15, %s16
  %s18 = sld [smem:[#allocation0]]
  $region101: #{gcnnet_collective_forward.1} parent=0
    _
  %s20 = ssub.s32 1, %s18
  %s21 = scalar_select 0, %s20, %s18
  loop: start=0, step=1, limit=4
  $region2: #{gcnnet_collective_forward.1} parent=0 // loop_pre_header
    _
  $region3: #{gcnnet_collective_forward.1} parent=0 // loop_header
    %s23 = sphi 0, %s27
    %p24 = scmp.ge.s32.totalorder %s23, 4
    %s33 = sphi 0, %s35
    %s36 = sphi 0, %s33
    %s37 = sphi 0, %s36
    %s53 = sphi 0, %s37
    %s59 = sphi 0, %s61
    %s62 = sphi 0, %s59
    %s63 = sphi 0, %s62
    %s79 = sphi 0, %s63
    %s85 = sphi 0, %s87
    %s88 = sphi 0, %s85
    %s89 = sphi 0, %s88
    %s105 = sphi 0, %s89
    %s109 = sphi 0, %s109
    %s111 = sphi 0, %s109
    %s112 = sphi 0, %s111
    %s126 = sphi 0, %s112
    %s130 = sphi 0, %s130
    %s132 = sphi 0, %s130
    %s133 = sphi 0, %s132
    %s147 = sphi 0, %s133
    %s151 = sphi 0, %s151
    %s153 = sphi 0, %s151
    %s154 = sphi 0, %s153
    %s168 = sphi 0, %s154
    %s172 = sphi 0, %s172
    %s174 = sphi 0, %s172
    %s175 = sphi 0, %s174
    %s189 = sphi 0, %s175
    %s193 = sphi 0, %s193
    %s195 = sphi 0, %s193
    %s196 = sphi 0, %s195
    %s210 = sphi 0, %s196
    %s214 = sphi 0, %s214
    %s216 = sphi 0, %s214
    %s217 = sphi 0, %s216
    %s231 = sphi 0, %s217
    %s235 = sphi 0, %s235
    %s237 = sphi 0, %s235
    %s238 = sphi 0, %s237
    %s252 = sphi 0, %s238
    %s256 = sphi 0, %s256
    %s258 = sphi 0, %s256
    %s259 = sphi 0, %s258
    %s273 = sphi 0, %s259
    %s277 = sphi 0, %s277
    %s279 = sphi 0, %s277
    %s280 = sphi 0, %s279
    %s294 = sphi 0, %s280
    %s298 = sphi 0, %s298
    %s300 = sphi 0, %s298
    %s301 = sphi 0, %s300
    %s315 = sphi 0, %s301
    %s319 = sphi 0, %s319
    %s321 = sphi 0, %s319
    %s322 = sphi 0, %s321
    %s336 = sphi 0, %s322
    %s340 = sphi 0, %s340
    %s342 = sphi 0, %s340
    %s343 = sphi 0, %s342
    %s357 = sphi 0, %s343
    %s363 = sphi 0, %s365
    %s366 = sphi 0, %s363
    %s367 = sphi 0, %s366
    %s383 = sphi 0, %s367
    %s389 = sphi 0, %s391
    %s392 = sphi 0, %s389
    %s393 = sphi 0, %s392
    %s409 = sphi 0, %s393
  $region4: #{gcnnet_collective_forward.1} parent=0 // loop_header_branch
    %26 = sbr.rel (%p24) target = $region8
  $region5: #{gcnnet_collective_forward.1} parent=0 // loop_body
    %s28 = ssub.s32 %s23, 1
    %s29 = ssub.s32 %s23, 2
    %s30 = sadd.s32 %s23, 1
    %s31 = ssub.s32 %s23, %s30
    %p32 = scmp.eq.s32.totalorder %s31, 0
    %s34 = sadd.s32 %s33, 1
    %s35 = scalar_select %p32, %s33, %s34
    %p38 = pneg %p32
    %p39 = scmp.eq.s32.totalorder %s23, 1
    %p40 = por %p38, %p39
    %p41 = scmp.ne.s32.totalorder %s33, %s36
    %p42 = scmp.eq.s32.totalorder %s23, 0
    %p43 = por %p41, %p42
    %p44 = scmp.ne.s32.totalorder %s33, %s36
    %p45 = scmp.eq.s32.totalorder %s28, 1
    %p46 = por %p44, %p45
    %p47 = scmp.ne.s32.totalorder %s36, %s37
    %p48 = scmp.eq.s32.totalorder %s28, 0
    %p49 = por %p47, %p48
    %p50 = scmp.ne.s32.totalorder %s36, %s37
    %p51 = scmp.eq.s32.totalorder %s29, 1
    %p52 = por %p50, %p51
    %p54 = scmp.ne.s32.totalorder %s37, %s53
    %p55 = scmp.eq.s32.totalorder %s29, 0
    %p56 = por %p54, %p55
    %s57 = ssub.s32 %s23, %s30
    %p58 = scmp.eq.s32.totalorder %s57, 0
    %s60 = sadd.s32 %s59, 1
    %s61 = scalar_select %p58, %s59, %s60
    %p64 = pneg %p58
    %p65 = scmp.eq.s32.totalorder %s23, 1
    %p66 = por %p64, %p65
    %p67 = scmp.ne.s32.totalorder %s59, %s62
    %p68 = scmp.eq.s32.totalorder %s23, 0
    %p69 = por %p67, %p68
    %p70 = scmp.ne.s32.totalorder %s59, %s62
    %p71 = scmp.eq.s32.totalorder %s28, 1
    %p72 = por %p70, %p71
    %p73 = scmp.ne.s32.totalorder %s62, %s63
    %p74 = scmp.eq.s32.totalorder %s28, 0
    %p75 = por %p73, %p74
    %p76 = scmp.ne.s32.totalorder %s62, %s63
    %p77 = scmp.eq.s32.totalorder %s29, 1
    %p78 = por %p76, %p77
    %p80 = scmp.ne.s32.totalorder %s63, %s79
    %p81 = scmp.eq.s32.totalorder %s29, 0
    %p82 = por %p80, %p81
    %s83 = ssub.s32 %s23, %s30
    %p84 = scmp.eq.s32.totalorder %s83, 0
    %s86 = sadd.s32 %s85, 1
    %s87 = scalar_select %p84, %s85, %s86
    %p90 = pneg %p84
    %p91 = scmp.eq.s32.totalorder %s23, 1
    %p92 = por %p90, %p91
    %p93 = scmp.ne.s32.totalorder %s85, %s88
    %p94 = scmp.eq.s32.totalorder %s23, 0
    %p95 = por %p93, %p94
    %p96 = scmp.ne.s32.totalorder %s85, %s88
    %p97 = scmp.eq.s32.totalorder %s28, 1
    %p98 = por %p96, %p97
    %p99 = scmp.ne.s32.totalorder %s88, %s89
    %p100 = scmp.eq.s32.totalorder %s28, 0
    %p101 = por %p99, %p100
    %p102 = scmp.ne.s32.totalorder %s88, %s89
    %p103 = scmp.eq.s32.totalorder %s29, 1
    %p104 = por %p102, %p103
    %p106 = scmp.ne.s32.totalorder %s89, %s105
    %p107 = scmp.eq.s32.totalorder %s29, 0
    %p108 = por %p106, %p107
    %s110 = sadd.s32 %s109, 1
    %p113 = scmp.eq.s32.totalorder %s23, 1
    %p114 = scmp.ne.s32.totalorder %s109, %s111
    %p115 = scmp.eq.s32.totalorder %s23, 0
    %p116 = por %p114, %p115
    %p117 = scmp.ne.s32.totalorder %s109, %s111
    %p118 = scmp.eq.s32.totalorder %s28, 1
    %p119 = por %p117, %p118
    %p120 = scmp.ne.s32.totalorder %s111, %s112
    %p121 = scmp.eq.s32.totalorder %s28, 0
    %p122 = por %p120, %p121
    %p123 = scmp.ne.s32.totalorder %s111, %s112
    %p124 = scmp.eq.s32.totalorder %s29, 1
    %p125 = por %p123, %p124
    %p127 = scmp.ne.s32.totalorder %s112, %s126
    %p128 = scmp.eq.s32.totalorder %s29, 0
    %p129 = por %p127, %p128
    %s131 = sadd.s32 %s130, 1
    %p134 = scmp.eq.s32.totalorder %s23, 1
    %p135 = scmp.ne.s32.totalorder %s130, %s132
    %p136 = scmp.eq.s32.totalorder %s23, 0
    %p137 = por %p135, %p136
    %p138 = scmp.ne.s32.totalorder %s130, %s132
    %p139 = scmp.eq.s32.totalorder %s28, 1
    %p140 = por %p138, %p139
    %p141 = scmp.ne.s32.totalorder %s132, %s133
    %p142 = scmp.eq.s32.totalorder %s28, 0
    %p143 = por %p141, %p142
    %p144 = scmp.ne.s32.totalorder %s132, %s133
    %p145 = scmp.eq.s32.totalorder %s29, 1
    %p146 = por %p144, %p145
    %p148 = scmp.ne.s32.totalorder %s133, %s147
    %p149 = scmp.eq.s32.totalorder %s29, 0
    %p150 = por %p148, %p149
    %s152 = sadd.s32 %s151, 1
    %p155 = scmp.eq.s32.totalorder %s23, 1
    %p156 = scmp.ne.s32.totalorder %s151, %s153
    %p157 = scmp.eq.s32.totalorder %s23, 0
    %p158 = por %p156, %p157
    %p159 = scmp.ne.s32.totalorder %s151, %s153
    %p160 = scmp.eq.s32.totalorder %s28, 1
    %p161 = por %p159, %p160
    %p162 = scmp.ne.s32.totalorder %s153, %s154
    %p163 = scmp.eq.s32.totalorder %s28, 0
    %p164 = por %p162, %p163
    %p165 = scmp.ne.s32.totalorder %s153, %s154
    %p166 = scmp.eq.s32.totalorder %s29, 1
    %p167 = por %p165, %p166
    %p169 = scmp.ne.s32.totalorder %s154, %s168
    %p170 = scmp.eq.s32.totalorder %s29, 0
    %p171 = por %p169, %p170
    %s173 = sadd.s32 %s172, 1
    %p176 = scmp.eq.s32.totalorder %s23, 1
    %p177 = scmp.ne.s32.totalorder %s172, %s174
    %p178 = scmp.eq.s32.totalorder %s23, 0
    %p179 = por %p177, %p178
    %p180 = scmp.ne.s32.totalorder %s172, %s174
    %p181 = scmp.eq.s32.totalorder %s28, 1
    %p182 = por %p180, %p181
    %p183 = scmp.ne.s32.totalorder %s174, %s175
    %p184 = scmp.eq.s32.totalorder %s28, 0
    %p185 = por %p183, %p184
    %p186 = scmp.ne.s32.totalorder %s174, %s175
    %p187 = scmp.eq.s32.totalorder %s29, 1
    %p188 = por %p186, %p187
    %p190 = scmp.ne.s32.totalorder %s175, %s189
    %p191 = scmp.eq.s32.totalorder %s29, 0
    %p192 = por %p190, %p191
    %s194 = sadd.s32 %s193, 1
    %p197 = scmp.eq.s32.totalorder %s23, 1
    %p198 = scmp.ne.s32.totalorder %s193, %s195
    %p199 = scmp.eq.s32.totalorder %s23, 0
    %p200 = por %p198, %p199
    %p201 = scmp.ne.s32.totalorder %s193, %s195
    %p202 = scmp.eq.s32.totalorder %s28, 1
    %p203 = por %p201, %p202
    %p204 = scmp.ne.s32.totalorder %s195, %s196
    %p205 = scmp.eq.s32.totalorder %s28, 0
    %p206 = por %p204, %p205
    %p207 = scmp.ne.s32.totalorder %s195, %s196
    %p208 = scmp.eq.s32.totalorder %s29, 1
    %p209 = por %p207, %p208
    %p211 = scmp.ne.s32.totalorder %s196, %s210
    %p212 = scmp.eq.s32.totalorder %s29, 0
    %p213 = por %p211, %p212
    %s215 = sadd.s32 %s214, 1
    %p218 = scmp.eq.s32.totalorder %s23, 1
    %p219 = scmp.ne.s32.totalorder %s214, %s216
    %p220 = scmp.eq.s32.totalorder %s23, 0
    %p221 = por %p219, %p220
    %p222 = scmp.ne.s32.totalorder %s214, %s216
    %p223 = scmp.eq.s32.totalorder %s28, 1
    %p224 = por %p222, %p223
    %p225 = scmp.ne.s32.totalorder %s216, %s217
    %p226 = scmp.eq.s32.totalorder %s28, 0
    %p227 = por %p225, %p226
    %p228 = scmp.ne.s32.totalorder %s216, %s217
    %p229 = scmp.eq.s32.totalorder %s29, 1
    %p230 = por %p228, %p229
    %p232 = scmp.ne.s32.totalorder %s217, %s231
    %p233 = scmp.eq.s32.totalorder %s29, 0
    %p234 = por %p232, %p233
    %s236 = sadd.s32 %s235, 1
    %p239 = scmp.eq.s32.totalorder %s23, 1
    %p240 = scmp.ne.s32.totalorder %s235, %s237
    %p241 = scmp.eq.s32.totalorder %s23, 0
    %p242 = por %p240, %p241
    %p243 = scmp.ne.s32.totalorder %s235, %s237
    %p244 = scmp.eq.s32.totalorder %s28, 1
    %p245 = por %p243, %p244
    %p246 = scmp.ne.s32.totalorder %s237, %s238
    %p247 = scmp.eq.s32.totalorder %s28, 0
    %p248 = por %p246, %p247
    %p249 = scmp.ne.s32.totalorder %s237, %s238
    %p250 = scmp.eq.s32.totalorder %s29, 1
    %p251 = por %p249, %p250
    %p253 = scmp.ne.s32.totalorder %s238, %s252
    %p254 = scmp.eq.s32.totalorder %s29, 0
    %p255 = por %p253, %p254
    %s257 = sadd.s32 %s256, 1
    %p260 = scmp.eq.s32.totalorder %s23, 1
    %p261 = scmp.ne.s32.totalorder %s256, %s258
    %p262 = scmp.eq.s32.totalorder %s23, 0
    %p263 = por %p261, %p262
    %p264 = scmp.ne.s32.totalorder %s256, %s258
    %p265 = scmp.eq.s32.totalorder %s28, 1
    %p266 = por %p264, %p265
    %p267 = scmp.ne.s32.totalorder %s258, %s259
    %p268 = scmp.eq.s32.totalorder %s28, 0
    %p269 = por %p267, %p268
    %p270 = scmp.ne.s32.totalorder %s258, %s259
    %p271 = scmp.eq.s32.totalorder %s29, 1
    %p272 = por %p270, %p271
    %p274 = scmp.ne.s32.totalorder %s259, %s273
    %p275 = scmp.eq.s32.totalorder %s29, 0
    %p276 = por %p274, %p275
    %s278 = sadd.s32 %s277, 1
    %p281 = scmp.eq.s32.totalorder %s23, 1
    %p282 = scmp.ne.s32.totalorder %s277, %s279
    %p283 = scmp.eq.s32.totalorder %s23, 0
    %p284 = por %p282, %p283
    %p285 = scmp.ne.s32.totalorder %s277, %s279
    %p286 = scmp.eq.s32.totalorder %s28, 1
    %p287 = por %p285, %p286
    %p288 = scmp.ne.s32.totalorder %s279, %s280
    %p289 = scmp.eq.s32.totalorder %s28, 0
    %p290 = por %p288, %p289
    %p291 = scmp.ne.s32.totalorder %s279, %s280
    %p292 = scmp.eq.s32.totalorder %s29, 1
    %p293 = por %p291, %p292
    %p295 = scmp.ne.s32.totalorder %s280, %s294
    %p296 = scmp.eq.s32.totalorder %s29, 0
    %p297 = por %p295, %p296
    %s299 = sadd.s32 %s298, 1
    %p302 = scmp.eq.s32.totalorder %s23, 1
    %p303 = scmp.ne.s32.totalorder %s298, %s300
    %p304 = scmp.eq.s32.totalorder %s23, 0
    %p305 = por %p303, %p304
    %p306 = scmp.ne.s32.totalorder %s298, %s300
    %p307 = scmp.eq.s32.totalorder %s28, 1
    %p308 = por %p306, %p307
    %p309 = scmp.ne.s32.totalorder %s300, %s301
    %p310 = scmp.eq.s32.totalorder %s28, 0
    %p311 = por %p309, %p310
    %p312 = scmp.ne.s32.totalorder %s300, %s301
    %p313 = scmp.eq.s32.totalorder %s29, 1
    %p314 = por %p312, %p313
    %p316 = scmp.ne.s32.totalorder %s301, %s315
    %p317 = scmp.eq.s32.totalorder %s29, 0
    %p318 = por %p316, %p317
    %s320 = sadd.s32 %s319, 1
    %p323 = scmp.eq.s32.totalorder %s23, 1
    %p324 = scmp.ne.s32.totalorder %s319, %s321
    %p325 = scmp.eq.s32.totalorder %s23, 0
    %p326 = por %p324, %p325
    %p327 = scmp.ne.s32.totalorder %s319, %s321
    %p328 = scmp.eq.s32.totalorder %s28, 1
    %p329 = por %p327, %p328
    %p330 = scmp.ne.s32.totalorder %s321, %s322
    %p331 = scmp.eq.s32.totalorder %s28, 0
    %p332 = por %p330, %p331
    %p333 = scmp.ne.s32.totalorder %s321, %s322
    %p334 = scmp.eq.s32.totalorder %s29, 1
    %p335 = por %p333, %p334
    %p337 = scmp.ne.s32.totalorder %s322, %s336
    %p338 = scmp.eq.s32.totalorder %s29, 0
    %p339 = por %p337, %p338
    %s341 = sadd.s32 %s340, 1
    %p344 = scmp.eq.s32.totalorder %s23, 1
    %p345 = scmp.ne.s32.totalorder %s340, %s342
    %p346 = scmp.eq.s32.totalorder %s23, 0
    %p347 = por %p345, %p346
    %p348 = scmp.ne.s32.totalorder %s340, %s342
    %p349 = scmp.eq.s32.totalorder %s28, 1
    %p350 = por %p348, %p349
    %p351 = scmp.ne.s32.totalorder %s342, %s343
    %p352 = scmp.eq.s32.totalorder %s28, 0
    %p353 = por %p351, %p352
    %p354 = scmp.ne.s32.totalorder %s342, %s343
    %p355 = scmp.eq.s32.totalorder %s29, 1
    %p356 = por %p354, %p355
    %p358 = scmp.ne.s32.totalorder %s343, %s357
    %p359 = scmp.eq.s32.totalorder %s29, 0
    %p360 = por %p358, %p359
    %s361 = ssub.s32 %s23, %s30
    %p362 = scmp.eq.s32.totalorder %s361, 0
    %s364 = sadd.s32 %s363, 1
    %s365 = scalar_select %p362, %s363, %s364
    %p368 = pneg %p362
    %p369 = scmp.eq.s32.totalorder %s23, 1
    %p370 = por %p368, %p369
    %p371 = scmp.ne.s32.totalorder %s363, %s366
    %p372 = scmp.eq.s32.totalorder %s23, 0
    %p373 = por %p371, %p372
    %p374 = scmp.ne.s32.totalorder %s363, %s366
    %p375 = scmp.eq.s32.totalorder %s28, 1
    %p376 = por %p374, %p375
    %p377 = scmp.ne.s32.totalorder %s366, %s367
    %p378 = scmp.eq.s32.totalorder %s28, 0
    %p379 = por %p377, %p378
    %p380 = scmp.ne.s32.totalorder %s366, %s367
    %p381 = scmp.eq.s32.totalorder %s29, 1
    %p382 = por %p380, %p381
    %p384 = scmp.ne.s32.totalorder %s367, %s383
    %p385 = scmp.eq.s32.totalorder %s29, 0
    %p386 = por %p384, %p385
    %s387 = ssub.s32 %s23, %s30
    %p388 = scmp.eq.s32.totalorder %s387, 0
    %s390 = sadd.s32 %s389, 1
    %s391 = scalar_select %p388, %s389, %s390
    %p394 = pneg %p388
    %p395 = scmp.eq.s32.totalorder %s23, 1
    %p396 = por %p394, %p395
    %p397 = scmp.ne.s32.totalorder %s389, %s392
    %p398 = scmp.eq.s32.totalorder %s23, 0
    %p399 = por %p397, %p398
    %p400 = scmp.ne.s32.totalorder %s389, %s392
    %p401 = scmp.eq.s32.totalorder %s28, 1
    %p402 = por %p400, %p401
    %p403 = scmp.ne.s32.totalorder %s392, %s393
    %p404 = scmp.eq.s32.totalorder %s28, 0
    %p405 = por %p403, %p404
    %p406 = scmp.ne.s32.totalorder %s392, %s393
    %p407 = scmp.eq.s32.totalorder %s29, 1
    %p408 = por %p406, %p407
    %p410 = scmp.ne.s32.totalorder %s393, %s409
    %p411 = scmp.eq.s32.totalorder %s29, 0
    %p412 = por %p410, %p411
    %p413 = scmp.le.s32.totalorder 1, %s23
    %p414 = scmp.lt.s32.totalorder %s23, 3
    %p415 = pnand %p413, %p414
    %p416 = pneg %p415
    // Predicated region
    $region9: #{gcnnet_collective_forward.1} parent=5 // pred_check
      _
    $region10: #{gcnnet_collective_forward.1} parent=5 // pred_check_branch
      %418 = sbr.rel (%p415) target = $region12
    $region11: #{gcnnet_collective_forward.1} parent=5 // pred_region
      %s419 = ssub.s32 %s23, 1
      // Predicated region
      $region13: #{gcnnet_collective_forward.1} parent=11 // pred_check
        %p420 = pneg %p122
      $region14: #{gcnnet_collective_forward.1} parent=11 // pred_check_branch
        %422 = sbr.rel (%p420) target = $region16
      $region15: #{gcnnet_collective_forward.1} parent=11 // pred_region
        _
      $region16: #{gcnnet_collective_forward.1} parent=11 // pred_fallthru
        _
      // Predicated region
      $region17: #{gcnnet_collective_forward.1} parent=11 // pred_check
        %p423 = pneg %p143
      $region18: #{gcnnet_collective_forward.1} parent=11 // pred_check_branch
        %425 = sbr.rel (%p423) target = $region20
      $region19: #{gcnnet_collective_forward.1} parent=11 // pred_region
        _
      $region20: #{gcnnet_collective_forward.1} parent=11 // pred_fallthru
        _
      // Predicated region
      $region21: #{gcnnet_collective_forward.1} parent=11 // pred_check
        %p426 = pneg %p164
      $region22: #{gcnnet_collective_forward.1} parent=11 // pred_check_branch
        %428 = sbr.rel (%p426) target = $region24
      $region23: #{gcnnet_collective_forward.1} parent=11 // pred_region
        _
      $region24: #{gcnnet_collective_forward.1} parent=11 // pred_fallthru
        _
      // Predicated region
      $region25: #{gcnnet_collective_forward.1} parent=11 // pred_check
        %p429 = pneg %p185
      $region26: #{gcnnet_collective_forward.1} parent=11 // pred_check_branch
        %431 = sbr.rel (%p429) target = $region28
      $region27: #{gcnnet_collective_forward.1} parent=11 // pred_region
        _
      $region28: #{gcnnet_collective_forward.1} parent=11 // pred_fallthru
        _
      // Predicated region
      $region29: #{gcnnet_collective_forward.1} parent=11 // pred_check
        %p432 = pneg %p206
      $region30: #{gcnnet_collective_forward.1} parent=11 // pred_check_branch
        %434 = sbr.rel (%p432) target = $region32
      $region31: #{gcnnet_collective_forward.1} parent=11 // pred_region
        _
      $region32: #{gcnnet_collective_forward.1} parent=11 // pred_fallthru
        _
      // Predicated region
      $region33: #{gcnnet_collective_forward.1} parent=11 // pred_check
        %p435 = pneg %p227
      $region34: #{gcnnet_collective_forward.1} parent=11 // pred_check_branch
        %437 = sbr.rel (%p435) target = $region36
      $region35: #{gcnnet_collective_forward.1} parent=11 // pred_region
        _
      $region36: #{gcnnet_collective_forward.1} parent=11 // pred_fallthru
        _
      // Predicated region
      $region37: #{gcnnet_collective_forward.1} parent=11 // pred_check
        %p438 = pneg %p248
      $region38: #{gcnnet_collective_forward.1} parent=11 // pred_check_branch
        %440 = sbr.rel (%p438) target = $region40
      $region39: #{gcnnet_collective_forward.1} parent=11 // pred_region
        _
      $region40: #{gcnnet_collective_forward.1} parent=11 // pred_fallthru
        _
      // Predicated region
      $region41: #{gcnnet_collective_forward.1} parent=11 // pred_check
        %p441 = pneg %p269
      $region42: #{gcnnet_collective_forward.1} parent=11 // pred_check_branch
        %443 = sbr.rel (%p441) target = $region44
      $region43: #{gcnnet_collective_forward.1} parent=11 // pred_region
        _
      $region44: #{gcnnet_collective_forward.1} parent=11 // pred_fallthru
        _
      // Predicated region
      $region45: #{gcnnet_collective_forward.1} parent=11 // pred_check
        %p444 = pneg %p290
      $region46: #{gcnnet_collective_forward.1} parent=11 // pred_check_branch
        %446 = sbr.rel (%p444) target = $region48
      $region47: #{gcnnet_collective_forward.1} parent=11 // pred_region
        _
      $region48: #{gcnnet_collective_forward.1} parent=11 // pred_fallthru
        _
      // Predicated region
      $region49: #{gcnnet_collective_forward.1} parent=11 // pred_check
        %p447 = pneg %p311
      $region50: #{gcnnet_collective_forward.1} parent=11 // pred_check_branch
        %449 = sbr.rel (%p447) target = $region52
      $region51: #{gcnnet_collective_forward.1} parent=11 // pred_region
        _
      $region52: #{gcnnet_collective_forward.1} parent=11 // pred_fallthru
        _
      // Predicated region
      $region53: #{gcnnet_collective_forward.1} parent=11 // pred_check
        %p450 = pneg %p332
      $region54: #{gcnnet_collective_forward.1} parent=11 // pred_check_branch
        %452 = sbr.rel (%p450) target = $region56
      $region55: #{gcnnet_collective_forward.1} parent=11 // pred_region
        _
      $region56: #{gcnnet_collective_forward.1} parent=11 // pred_fallthru
        _
      // Predicated region
      $region57: #{gcnnet_collective_forward.1} parent=11 // pred_check
        %p453 = pneg %p353
      $region58: #{gcnnet_collective_forward.1} parent=11 // pred_check_branch
        %455 = sbr.rel (%p453) target = $region60
      $region59: #{gcnnet_collective_forward.1} parent=11 // pred_region
        _
      $region60: #{gcnnet_collective_forward.1} parent=11 // pred_fallthru
        _
    $region12: #{gcnnet_collective_forward.1} parent=5 // pred_fallthru
      _
    %p456 = scmp.lt.s32.totalorder %s23, 2
    // Predicated region
    $region61: #{gcnnet_collective_forward.1} parent=5 // pred_check
      %p457 = pneg %p456
    $region62: #{gcnnet_collective_forward.1} parent=5 // pred_check_branch
      %459 = sbr.rel (%p457) target = $region64
    $region63: #{gcnnet_collective_forward.1} parent=5 // pred_region
      // Predicated region
      $region65: #{gcnnet_collective_forward.1} parent=63 // pred_check
        %p460 = pneg %p43
      $region66: #{gcnnet_collective_forward.1} parent=63 // pred_check_branch
        %462 = sbr.rel (%p460) target = $region68
      $region67: #{gcnnet_collective_forward.1} parent=63 // pred_region
        %p463 = scmp.lt.s32.totalorder %s23, 1
        %s464 = scalar_select %p463, %s23, 1
        %s465 = smul.addr %s464, 3
        %s466 = smul.addr %s465, 8
        %s467 = scalar_lea.vmem %s0, %s466
      $region68: #{gcnnet_collective_forward.1} parent=63 // pred_fallthru
        _
      // Predicated region
      $region69: #{gcnnet_collective_forward.1} parent=63 // pred_check
        %p468 = pneg %p69
      $region70: #{gcnnet_collective_forward.1} parent=63 // pred_check_branch
        %470 = sbr.rel (%p468) target = $region72
      $region71: #{gcnnet_collective_forward.1} parent=63 // pred_region
        %p471 = scmp.lt.s32.totalorder %s23, 1
        %s472 = scalar_select %p471, %s23, 1
        %s473 = smul.addr %s472, 3
        %s474 = smul.addr %s473, 8
        %s475 = scalar_lea.vmem %s1, %s474
      $region72: #{gcnnet_collective_forward.1} parent=63 // pred_fallthru
        _
      // Predicated region
      $region73: #{gcnnet_collective_forward.1} parent=63 // pred_check
        %p476 = pneg %p95
      $region74: #{gcnnet_collective_forward.1} parent=63 // pred_check_branch
        %478 = sbr.rel (%p476) target = $region76
      $region75: #{gcnnet_collective_forward.1} parent=63 // pred_region
        %p479 = scmp.lt.s32.totalorder %s23, 1
        %s480 = scalar_select %p479, %s23, 1
        %s481 = smul.addr %s480, 2
        %s482 = scalar_lea.vmem %s2, %s481
      $region76: #{gcnnet_collective_forward.1} parent=63 // pred_fallthru
        _
    $region64: #{gcnnet_collective_forward.1} parent=5 // pred_fallthru
      _
    %p483 = scmp.le.s32.totalorder 1, %s23
    %p484 = scmp.lt.s32.totalorder %s23, 3
    %p485 = pnand %p483, %p484
    %p486 = pneg %p485
    // Predicated region
    $region77: #{gcnnet_collective_forward.1} parent=5 // pred_check
      _
    $region78: #{gcnnet_collective_forward.1} parent=5 // pred_check_branch
      %488 = sbr.rel (%p485) target = $region80
    $region79: #{gcnnet_collective_forward.1} parent=5 // pred_region
      %s489 = ssub.s32 %s23, 1
      %p490 = scmp.lt.s32.totalorder %s28, 1
      %s491 = scalar_select %p490, %s28, 1
      %s492 = smul.addr %s491, 3
      %s493 = smul.addr %s492, 8
      %s494 = scalar_lea.vmem %s0, %s493
      %p495 = pneg %p49
      %p496 = pneg %p46
      %p497 = scmp.lt.s32.totalorder %s28, 1
      %s498 = scalar_select %p497, %s28, 1
      %s499 = smul.addr %s498, 3
      %s500 = smul.addr %s499, 8
      %s501 = scalar_lea.vmem %s1, %s500
      %p502 = pneg %p75
      %p503 = pneg %p72
      %p504 = scmp.lt.s32.totalorder %s28, 1
      %s505 = scalar_select %p504, %s28, 1
      %s506 = smul.addr %s505, 2
      %s507 = scalar_lea.vmem %s2, %s506
      %p508 = pneg %p101
      %p509 = pneg %p98
      %p510 = pneg %p122
      %p511 = pneg %p119
      %p512 = pneg %p143
      %p513 = pneg %p140
      %p514 = pneg %p164
      %p515 = pneg %p161
      %p516 = pneg %p185
      %p517 = pneg %p182
      %p518 = pneg %p206
      %p519 = pneg %p203
      %p520 = pneg %p227
      %p521 = pneg %p224
      %p522 = pneg %p248
      %p523 = pneg %p245
      %p524 = pneg %p269
      %p525 = pneg %p266
      %p526 = pneg %p290
      %p527 = pneg %p287
      %p528 = pneg %p311
      %p529 = pneg %p308
      %p530 = pneg %p332
      %p531 = pneg %p329
      %p532 = pneg %p353
      %p533 = pneg %p350
      %p534 = pneg %p379
      %p535 = pneg %p376
      %p536 = scmp.lt.s32.totalorder %s28, 1
      %s537 = scalar_select %p536, %s28, 1
      %s538 = smul.addr %s537, 2
      %s539 = smul.addr %s538, 8
      %s540 = scalar_lea.vmem %s15, %s539
      %p541 = pneg %p405
      %p542 = pneg %p402
      %p543 = scmp.lt.s32.totalorder %s28, 1
      %s544 = scalar_select %p543, %s28, 1
      %s545 = smul.addr %s544, 3
      %s546 = smul.addr %s545, 8
      %s547 = scalar_lea.vmem %s16, %s546
      %p548 = scmp.lt.s32.totalorder %s28, 1
      %s549 = scalar_select %p548, %s28, 1
      %s550 = smul.addr %s549, 3
      %s551 = smul.addr %s550, 8
      %s552 = scalar_lea.vmem %s0, %s551
      %p553 = scmp.lt.s32.totalorder %s28, 1
      %s554 = scalar_select %p553, %s28, 1
      %s555 = smul.addr %s554, 3
      %s556 = smul.addr %s555, 8
      %s557 = scalar_lea.vmem %s1, %s556
      %p558 = scmp.lt.s32.totalorder %s28, 1
      %s559 = scalar_select %p558, %s28, 1
      %s560 = smul.addr %s559, 2
      %s561 = scalar_lea.vmem %s2, %s560
      %p562 = scmp.lt.s32.totalorder %s28, 1
      %s563 = scalar_select %p562, %s28, 1
      %s564 = smul.addr %s563, 2
      %s565 = smul.addr %s564, 8
      %s566 = scalar_lea.vmem %s15, %s565
      %p567 = scmp.lt.s32.totalorder %s28, 1
      %s568 = scalar_select %p567, %s28, 1
      %s569 = smul.addr %s568, 3
      %s570 = smul.addr %s569, 8
      %s571 = scalar_lea.vmem %s16, %s570
      %v572 = vld [vmem:[%s552] sm:$0xff]
      %v573 = vld [vmem:[%s552 + $0x8] sm:$0xff]
      %v574 = vld [vmem:[%s552 + $0x10] sm:$0xff]
      %v575 = vld [vmem:[%s3] sm:$0xff]
      %v576 = vld [vmem:[%s3 + $0x8] sm:$0xff]
      %v577 = vld [vmem:[%s3 + $0x10] sm:$0xff]
      %v578 = vld [vmem:[%s3 + $0x18] sm:$0xff]
      %v579 = vld [vmem:[%s3 + $0x20] sm:$0xff]
      %v580 = vld [vmem:[%s3 + $0x28] sm:$0xff]
      %v581 = vld [vmem:[%s3 + $0x30] sm:$0xff]
      %v582 = vld [vmem:[%s3 + $0x38] sm:$0xff]
      %v583 = vld [vmem:[%s4] sm:$0x1]
      %v585 = vlaneseq
      %v586 = vshrl.u32 %v585, 7
      %v587 = vsub.s32 0, %v586
      %v588 = vrot.slane %v583, %v587
      %vm590 = vcmask 523264
      %v592 = vsel %vm590, %v572, 0
      %v595 = vsel %vm590, %v573, 0
      %v598 = vsel %vm590, %v574, 0
      %600 = vmatprep.subr.mxu0 0.0
      %601 = vmatpush1.msra.mxu0 0.0
      %602 = vmatprep.subr.mxu0 0.0
      %603 = vmatpush1.msra.mxu0 0.0
      %604 = vmatprep.subr.mxu0 0.0
      %605 = vmatpush1.msra.mxu0 0.0
      %606 = vmatprep.subr.mxu0 0.0
      %607 = vmatpush1.msra.mxu0 0.0
      %608 = vmatprep.subr.mxu0 0.0
      %609 = vmatpush1.msra.mxu0 0.0
      %610 = vmatprep.subr.mxu0 0.0
      %611 = vmatpush1.msra.mxu0 0.0
      %612 = vmatprep.subr.mxu0 0.0
      %613 = vmatpush1.msra.mxu0 0.0
      %614 = vmatprep.subr.mxu0 0.0
      %615 = vmatpush1.msra.mxu0 0.0
      %616 = vmatprep.subr.mxu0 0.0
      %617 = vmatpush1.msra.mxu0 %v582
      %618 = vmatprep.subr.mxu0 0.0
      %619 = vmatpush1.msra.mxu0 %v581
      %620 = vmatprep.subr.mxu0 0.0
      %621 = vmatpush1.msra.mxu0 %v580
      %622 = vmatprep.subr.mxu0 0.0
      %623 = vmatpush1.msra.mxu0 %v579
      %624 = vmatprep.subr.mxu0 0.0
      %625 = vmatpush1.msra.mxu0 %v578
      %626 = vmatprep.subr.mxu0 0.0
      %627 = vmatpush1.msra.mxu0 %v577
      %628 = vmatprep.subr.mxu0 0.0
      %629 = vmatpush1.msra.mxu0 %v576
      %630 = vmatprep.subr.mxu0 0.0
      %631 = vmatpush1.msra.mxu0 %v575
      %632 = vmatprep.subr.mxu0 0.0
      %633 = vmatpush2.msra.mxu0 0.0
      %634 = vmatprep.subr.mxu0 0.0
      %635 = vmatpush2.msra.mxu0 0.0
      %636 = vmatprep.subr.mxu0 0.0
      %637 = vmatpush2.msra.mxu0 0.0
      %638 = vmatprep.subr.mxu0 0.0
      %639 = vmatpush2.msra.mxu0 0.0
      %640 = vmatprep.subr.mxu0 0.0
      %641 = vmatpush2.msra.mxu0 0.0
      %642 = vmatprep.subr.mxu0 0.0
      %643 = vmatpush2.msra.mxu0 0.0
      %644 = vmatprep.subr.mxu0 0.0
      %645 = vmatpush2.msra.mxu0 0.0
      %646 = vmatprep.subr.mxu0 0.0
      %647 = vmatpush2.msra.mxu0 0.0
      %648 = vmatprep.subr.mxu0 0.0
      %649 = vmatpush2.msra.mxu0 0.0
      %650 = vmatprep.subr.mxu0 0.0
      %651 = vmatpush2.msra.mxu0 0.0
      %652 = vmatprep.subr.mxu0 0.0
      %653 = vmatpush2.msra.mxu0 0.0
      %654 = vmatprep.subr.mxu0 0.0
      %655 = vmatpush2.msra.mxu0 0.0
      %656 = vmatprep.subr.mxu0 0.0
      %657 = vmatpush2.msra.mxu0 0.0
      %658 = vmatprep.subr.mxu0 0.0
      %659 = vmatpush2.msra.mxu0 0.0
      %660 = vmatprep.subr.mxu0 0.0
      %661 = vmatpush2.msra.mxu0 0.0
      %662 = vmatprep.subr.mxu0 0.0
      %663 = vmatpush2.msra.mxu0 0.0
      %664 = vmatprep.mubr.f32.mxu0 0.0
      %665 = vmatmul.mubr.f32.gmra.mxu0 %v592
      %v666 = vpop.f32.mrf.mxu0
      %v667 = vadd.f32 %v588, %v666
      %v668 = vpop.f32.mrf.mxu0
      %669 = vmatprep.mubr.f32.mxu0 0.0
      %670 = vmatmul.mubr.f32.gmra.mxu0 %v595
      %v671 = vpop.f32.mrf.mxu0
      %v672 = vadd.f32 %v588, %v671
      %v673 = vpop.f32.mrf.mxu0
      %674 = vmatprep.mubr.f32.mxu0 0.0
      %675 = vmatmul.mubr.f32.gmra.mxu0 %v598
      %v676 = vpop.f32.mrf.mxu0
      %v677 = vadd.f32 %v588, %v676
      %v678 = vpop.f32.mrf.mxu0
      %679 = vdwg.mxu0
      %v680 = vld [vmem:[%s5] sm:$0x1]
      %v681 = vld [vmem:[%s6] sm:$0x1]
      %vm682 = vcmask 261120
      %v683 = vsel %vm682, %v667, 0.0
      %684 = vadd.xlane.f32.xlu0 %v683
      %v685 = vpop.xlane.xlu0 %684
      %v686 = vsel %vm682, %v672, 0.0
      %687 = vadd.xlane.f32.xlu0 %v686
      %v688 = vpop.xlane.xlu0 %687
      %v689 = vsel %vm682, %v677, 0.0
      %690 = vadd.xlane.f32.xlu0 %v689
      %v691 = vpop.xlane.xlu0 %690
      %v692 = vrcp.pop 32.0
      %v693 = vmul.f32 %v685, %v692
      %v694 = vmul.f32 %v688, %v692
      %v695 = vmul.f32 %v691, %v692
      %v696 = vsub.f32 %v667, %v693
      %v697 = vsub.f32 %v672, %v694
      %v698 = vsub.f32 %v677, %v695
      %v699 = vmul.f32 %v696, %v696
      %v700 = vmul.f32 %v697, %v697
      %v701 = vmul.f32 %v698, %v698
      %v702 = vsel %vm682, %v699, 0.0
      %703 = vadd.xlane.f32.xlu0 %v702
      %v704 = vpop.xlane.xlu0 %703
      %v705 = vsel %vm682, %v700, 0.0
      %706 = vadd.xlane.f32.xlu0 %v705
      %v707 = vpop.xlane.xlu0 %706
      %v708 = vsel %vm682, %v701, 0.0
      %709 = vadd.xlane.f32.xlu0 %v708
      %v710 = vpop.xlane.xlu0 %709
      %v711 = vmul.f32 %v704, %v692
      %v712 = vmul.f32 %v707, %v692
      %v713 = vmul.f32 %v710, %v692
      %v714 = vadd.f32 %v711, 1e-05
      %v715 = vadd.f32 %v712, 1e-05
      %v716 = vadd.f32 %v713, 1e-05
      %v717 = vrsqrt.pop %v714
      %v718 = vrsqrt.pop %v715
      %v719 = vrsqrt.pop %v716
      %v720 = vmul.f32 %v696, %v717
      %v721 = vmul.f32 %v697, %v718
      %v722 = vmul.f32 %v698, %v719
      %v724 = vlaneseq
      %v725 = vshrl.u32 %v724, 7
      %v726 = vsub.s32 0, %v725
      %v727 = vrot.slane %v680, %v726
      %v729 = vmul.f32 %v720, %v727
      %v730 = vmul.f32 %v721, %v727
      %v731 = vmul.f32 %v722, %v727
      %v733 = vlaneseq
      %v734 = vshrl.u32 %v733, 7
      %v735 = vsub.s32 0, %v734
      %v736 = vrot.slane %v681, %v735
      %v738 = vadd.f32 %v729, %v736
      %v739 = vadd.f32 %v730, %v736
      %v740 = vadd.f32 %v731, %v736
      %v741 = vmax.f32 %v738, 0.0
      %v742 = vmax.f32 %v739, 0.0
      %v743 = vmax.f32 %v740, 0.0
      %v744 = vlaneseq
      %v745 = vshrl.u32 %v744, 7
      %v746 = vadd.s32 %v745, 8
      %v747 = vadd.s32 %v745, 16
      %v748 = vlaneseq
      %v749 = vand.u32 %v748, 127
      %vm750 = vcmp.lt.s32.totalorder %v745, 0
      %v751 = vsub.s32 0, %v745
      %v752 = vsel %vm750, %v751, %v745
      %v753 = vshrl.u32 %v752, 3
      %v754 = vand.u32 %v752, 7
      %v755 = vsub.s32 0, %v754
      %v756 = vsel %vm750, %v755, %v754
      %vm757 = vcmp.lt.s32.totalorder %v746, 0
      %v758 = vsub.s32 0, %v746
      %v759 = vsel %vm757, %v758, %v746
      %v760 = vshrl.u32 %v759, 3
      %v761 = vand.u32 %v759, 7
      %v762 = vsub.s32 0, %v761
      %v763 = vsel %vm757, %v762, %v761
      %vm764 = vcmp.lt.s32.totalorder %v747, 0
      %v765 = vsub.s32 0, %v747
      %v766 = vsel %vm764, %v765, %v747
      %v767 = vshrl.u32 %v766, 3
      %v768 = vand.u32 %v766, 7
      %v769 = vsub.s32 0, %v768
      %v770 = vsel %vm764, %v769, %v768
      %vm771 = vcmp.ne.s32.totalorder %v756, 0
      %vm772 = vcmp.ne.s32.totalorder %v763, 0
      %vm773 = vcmp.ne.s32.totalorder %v770, 0
      %vm774 = vcmp.lt.s32.totalorder %v756, 0
      %vm775 = vcmp.lt.s32.totalorder %v763, 0
      %vm776 = vcmp.lt.s32.totalorder %v770, 0
      %vm777 = vmand %vm774, %vm771
      %vm778 = vmand %vm775, %vm772
      %vm779 = vmand %vm776, %vm773
      %v780 = vadd.s32 %v756, 8
      %v781 = vadd.s32 %v763, 8
      %v782 = vadd.s32 %v770, 8
      %v783 = vsel %vm777, %v780, %v756
      %v784 = vsel %vm778, %v781, %v763
      %v785 = vsel %vm779, %v782, %v770
      %vm786 = vcmp.lt.s32.totalorder %v783, 6
      %vm787 = vcmp.lt.s32.totalorder %v784, 6
      %vm788 = vcmp.lt.s32.totalorder %v785, 6
      %vm789 = vcmp.lt.s32.totalorder %v749, 0
      %v790 = vsub.s32 0, %v749
      %v791 = vsel %vm789, %v790, %v749
      %v792 = vshrl.u32 %v791, 3
      %v793 = vand.u32 %v791, 7
      %v794 = vsub.s32 0, %v793
      %v795 = vsel %vm789, %v794, %v793
      %vm796 = vcmp.ne.s32.totalorder %v795, 0
      %vm797 = vcmp.lt.s32.totalorder %v795, 0
      %vm798 = vmand %vm797, %vm796
      %v799 = vadd.s32 %v795, 8
      %v800 = vsel %vm798, %v799, %v795
      %vm801 = vcmp.lt.s32.totalorder %v800, 6
      %v802 = vsel %vm786, 1, 0
      %v803 = vsel %vm787, 1, 0
      %v804 = vsel %vm788, 1, 0
      %vm805 = vcmp.eq.s32.totalorder %v802, 1
      %vm806 = vcmp.eq.s32.totalorder %v803, 1
      %vm807 = vcmp.eq.s32.totalorder %v804, 1
      %v808 = vsel %vm805, %v741, 0.0
      %v809 = vsel %vm806, %v742, 0.0
      %v810 = vsel %vm807, %v743, 0.0
      %v811 = vld [vmem:[%s557] sm:$0xff]
      %v812 = vld [vmem:[%s557 + $0x8] sm:$0xff]
      %v813 = vld [vmem:[%s557 + $0x10] sm:$0xff]
      %v814 = vld [vmem:[%s561] sm:$0x3]
      %816 = vset.pattern.permute.xlu0 0
      %817 = vperm.xlu0 %816, %v811
      %v818 = vpop.permute.xlu0 %817
      %821 = vset.pattern.permute.xlu0 0
      %822 = vperm.xlu0 %821, %v812
      %v823 = vpop.permute.xlu0 %822
      %826 = vset.pattern.permute.xlu0 0
      %827 = vperm.xlu0 %826, %v813
      %v828 = vpop.permute.xlu0 %827
      %v830 = vlaneseq
      %v831 = vshrl.u32 %v830, 7
      %v832 = vsub.s32 0, %v831
      %v833 = vrot.slane %v814, %v832
      %v834 = vsub.f32 %v818, %v833
      %v835 = vsub.f32 %v823, %v833
      %v836 = vsub.f32 %v828, %v833
      %837 = vset.pattern.permute.xlu0 1
      %838 = vperm.xlu0 %837, %v811
      %v839 = vpop.permute.xlu0 %838
      %841 = vset.pattern.permute.xlu0 1
      %842 = vperm.xlu0 %841, %v812
      %v843 = vpop.permute.xlu0 %842
      %845 = vset.pattern.permute.xlu0 1
      %846 = vperm.xlu0 %845, %v813
      %v847 = vpop.permute.xlu0 %846
      %v849 = vlaneseq
      %v850 = vshrl.u32 %v849, 7
      %v851 = vsub.s32 1, %v850
      %v852 = vrot.slane %v814, %v851
      %v853 = vsub.f32 %v839, %v852
      %v854 = vsub.f32 %v843, %v852
      %v855 = vsub.f32 %v847, %v852
      %v856 = vmul.f32 %v834, %v834
      %v857 = vmul.f32 %v835, %v835
      %v858 = vmul.f32 %v836, %v836
      %v859 = vmul.f32 %v853, %v853
      %v860 = vmul.f32 %v854, %v854
      %v861 = vmul.f32 %v855, %v855
      %v862 = vadd.f32 %v856, %v859
      %v863 = vadd.f32 %v857, %v860
      %v864 = vadd.f32 %v858, %v861
      %vm865 = vcmp.gt.f32.partialorder %v862, 2.56
      %vm866 = vcmp.gt.f32.partialorder %v863, 2.56
      %vm867 = vcmp.gt.f32.partialorder %v864, 2.56
      %vm868 = vmxor %vm801, 1
      %v869 = vsel %vm868, 1, 0
      %vm870 = vcmp.eq.s32.totalorder %v869, 1
      %vm871 = vmor %vm865, %vm870
      %vm872 = vmor %vm866, %vm870
      %vm873 = vmor %vm867, %vm870
      %v874 = vld [vmem:[%s7] sm:$0xff]
      %v875 = vld [vmem:[%s7 + $0x8] sm:$0xff]
      %v876 = vld [vmem:[%s7 + $0x10] sm:$0xff]
      %v877 = vld [vmem:[%s7 + $0x18] sm:$0xff]
      %v878 = vld [vmem:[%s8] sm:$0x1]
      %v880 = vlaneseq
      %v881 = vshrl.u32 %v880, 7
      %v882 = vsub.s32 0, %v881
      %v883 = vrot.slane %v878, %v882
      %v886 = vsel %vm682, %v808, 0
      %v889 = vsel %vm682, %v809, 0
      %v892 = vsel %vm682, %v810, 0
      %894 = vmatprep.subr.mxu0 0.0
      %895 = vmatpush1.msra.mxu0 0.0
      %896 = vmatprep.subr.mxu0 0.0
      %897 = vmatpush1.msra.mxu0 0.0
      %898 = vmatprep.subr.mxu0 0.0
      %899 = vmatpush1.msra.mxu0 0.0
      %900 = vmatprep.subr.mxu0 0.0
      %901 = vmatpush1.msra.mxu0 0.0
      %902 = vmatprep.subr.mxu0 0.0
      %903 = vmatpush1.msra.mxu0 0.0
      %904 = vmatprep.subr.mxu0 0.0
      %905 = vmatpush1.msra.mxu0 0.0
      %906 = vmatprep.subr.mxu0 0.0
      %907 = vmatpush1.msra.mxu0 0.0
      %908 = vmatprep.subr.mxu0 0.0
      %909 = vmatpush1.msra.mxu0 0.0
      %910 = vmatprep.subr.mxu0 0.0
      %911 = vmatpush1.msra.mxu0 0.0
      %912 = vmatprep.subr.mxu0 0.0
      %913 = vmatpush1.msra.mxu0 0.0
      %914 = vmatprep.subr.mxu0 0.0
      %915 = vmatpush1.msra.mxu0 0.0
      %916 = vmatprep.subr.mxu0 0.0
      %917 = vmatpush1.msra.mxu0 0.0
      %918 = vmatprep.subr.mxu0 0.0
      %919 = vmatpush1.msra.mxu0 %v877
      %920 = vmatprep.subr.mxu0 0.0
      %921 = vmatpush1.msra.mxu0 %v876
      %922 = vmatprep.subr.mxu0 0.0
      %923 = vmatpush1.msra.mxu0 %v875
      %924 = vmatprep.subr.mxu0 0.0
      %925 = vmatpush1.msra.mxu0 %v874
      %926 = vmatprep.subr.mxu0 0.0
      %927 = vmatpush2.msra.mxu0 0.0
      %928 = vmatprep.subr.mxu0 0.0
      %929 = vmatpush2.msra.mxu0 0.0
      %930 = vmatprep.subr.mxu0 0.0
      %931 = vmatpush2.msra.mxu0 0.0
      %932 = vmatprep.subr.mxu0 0.0
      %933 = vmatpush2.msra.mxu0 0.0
      %934 = vmatprep.subr.mxu0 0.0
      %935 = vmatpush2.msra.mxu0 0.0
      %936 = vmatprep.subr.mxu0 0.0
      %937 = vmatpush2.msra.mxu0 0.0
      %938 = vmatprep.subr.mxu0 0.0
      %939 = vmatpush2.msra.mxu0 0.0
      %940 = vmatprep.subr.mxu0 0.0
      %941 = vmatpush2.msra.mxu0 0.0
      %942 = vmatprep.subr.mxu0 0.0
      %943 = vmatpush2.msra.mxu0 0.0
      %944 = vmatprep.subr.mxu0 0.0
      %945 = vmatpush2.msra.mxu0 0.0
      %946 = vmatprep.subr.mxu0 0.0
      %947 = vmatpush2.msra.mxu0 0.0
      %948 = vmatprep.subr.mxu0 0.0
      %949 = vmatpush2.msra.mxu0 0.0
      %950 = vmatprep.subr.mxu0 0.0
      %951 = vmatpush2.msra.mxu0 0.0
      %952 = vmatprep.subr.mxu0 0.0
      %953 = vmatpush2.msra.mxu0 0.0
      %954 = vmatprep.subr.mxu0 0.0
      %955 = vmatpush2.msra.mxu0 0.0
      %956 = vmatprep.subr.mxu0 0.0
      %957 = vmatpush2.msra.mxu0 0.0
      %958 = vmatprep.mubr.f32.mxu0 0.0
      %959 = vmatmul.mubr.f32.gmra.mxu0 %v886
      %v960 = vpop.f32.mrf.mxu0
      %v961 = vadd.f32 %v883, %v960
      %v962 = vpop.f32.mrf.mxu0
      %963 = vmatprep.mubr.f32.mxu0 0.0
      %964 = vmatmul.mubr.f32.gmra.mxu0 %v889
      %v965 = vpop.f32.mrf.mxu0
      %v966 = vadd.f32 %v883, %v965
      %v967 = vpop.f32.mrf.mxu0
      %968 = vmatprep.mubr.f32.mxu0 0.0
      %969 = vmatmul.mubr.f32.gmra.mxu0 %v892
      %v970 = vpop.f32.mrf.mxu0
      %v971 = vadd.f32 %v883, %v970
      %v972 = vpop.f32.mrf.mxu0
      %973 = vdwg.mxu0
      %977 = vrot.lane.b32.xlu0 %v961, 96
      %v978 = vpop.permute.xlu0 %977
      %979 = vrot.lane.b32.xlu0 %v966, 96
      %v980 = vpop.permute.xlu0 %979
      %981 = vrot.lane.b32.xlu0 %v971, 96
      %v982 = vpop.permute.xlu0 %981
      %v983 = vsel %vm682, %v961, 0
      %v985 = vsel %vm682, %v966, 0
      %v987 = vsel %vm682, %v971, 0
      %v989 = vsel %vm682, %v978, 0
      %v991 = vsel %vm682, %v980, 0
      %v993 = vsel %vm682, %v982, 0
      %995 = vmatprep.subr.mxu0 0.0
      %996 = vmatpush1.xpose.msra.mxu0 0.0
      %997 = vmatprep.subr.mxu0 0.0
      %998 = vmatpush1.xpose.msra.mxu0 0.0
      %999 = vmatprep.subr.mxu0 0.0
      %1000 = vmatpush1.xpose.msra.mxu0 0.0
      %1001 = vmatprep.subr.mxu0 0.0
      %1002 = vmatpush1.xpose.msra.mxu0 0.0
      %1003 = vmatprep.subr.mxu0 0.0
      %1004 = vmatpush1.xpose.msra.mxu0 0.0
      %1005 = vmatprep.subr.mxu0 0.0
      %1006 = vmatpush1.xpose.msra.mxu0 0.0
      %1007 = vmatprep.subr.mxu0 0.0
      %1008 = vmatpush1.xpose.msra.mxu0 0.0
      %1009 = vmatprep.subr.mxu0 0.0
      %1010 = vmatpush1.xpose.msra.mxu0 0.0
      %1011 = vmatprep.subr.mxu0 0.0
      %1012 = vmatpush1.xpose.msra.mxu0 0.0
      %1013 = vmatprep.subr.mxu0 0.0
      %1014 = vmatpush1.xpose.msra.mxu0 0.0
      %1015 = vmatprep.subr.mxu0 0.0
      %1016 = vmatpush1.xpose.msra.mxu0 0.0
      %1017 = vmatprep.subr.mxu0 0.0
      %1018 = vmatpush1.xpose.msra.mxu0 0.0
      %1019 = vmatprep.subr.mxu0 0.0
      %1020 = vmatpush1.xpose.msra.mxu0 0.0
      %1021 = vmatprep.subr.mxu0 0.0
      %1022 = vmatpush1.xpose.msra.mxu0 %v993
      %1023 = vmatprep.subr.mxu0 0.0
      %1024 = vmatpush1.xpose.msra.mxu0 %v991
      %1025 = vmatprep.subr.mxu0 0.0
      %1026 = vmatpush1.xpose.msra.mxu0 %v989
      %1027 = vmatprep.subr.mxu0 0.0
      %1028 = vmatpush2.xpose.msra.mxu0 0.0
      %1029 = vmatprep.subr.mxu0 0.0
      %1030 = vmatpush2.xpose.msra.mxu0 0.0
      %1031 = vmatprep.subr.mxu0 0.0
      %1032 = vmatpush2.xpose.msra.mxu0 0.0
      %1033 = vmatprep.subr.mxu0 0.0
      %1034 = vmatpush2.xpose.msra.mxu0 0.0
      %1035 = vmatprep.subr.mxu0 0.0
      %1036 = vmatpush2.xpose.msra.mxu0 0.0
      %1037 = vmatprep.subr.mxu0 0.0
      %1038 = vmatpush2.xpose.msra.mxu0 0.0
      %1039 = vmatprep.subr.mxu0 0.0
      %1040 = vmatpush2.xpose.msra.mxu0 0.0
      %1041 = vmatprep.subr.mxu0 0.0
      %1042 = vmatpush2.xpose.msra.mxu0 0.0
      %1043 = vmatprep.subr.mxu0 0.0
      %1044 = vmatpush2.xpose.msra.mxu0 0.0
      %1045 = vmatprep.subr.mxu0 0.0
      %1046 = vmatpush2.xpose.msra.mxu0 0.0
      %1047 = vmatprep.subr.mxu0 0.0
      %1048 = vmatpush2.xpose.msra.mxu0 0.0
      %1049 = vmatprep.subr.mxu0 0.0
      %1050 = vmatpush2.xpose.msra.mxu0 0.0
      %1051 = vmatprep.subr.mxu0 0.0
      %1052 = vmatpush2.xpose.msra.mxu0 0.0
      %1053 = vmatprep.subr.mxu0 0.0
      %1054 = vmatpush2.xpose.msra.mxu0 0.0
      %1055 = vmatprep.subr.mxu0 0.0
      %1056 = vmatpush2.xpose.msra.mxu0 0.0
      %1057 = vmatprep.subr.mxu0 0.0
      %1058 = vmatpush2.xpose.msra.mxu0 0.0
      %1059 = vmatprep.mubr.f32.mxu0 0.0
      %1060 = vmatmul.mubr.f32.gmra.mxu0 %v983
      %v1061 = vpop.f32.mrf.mxu0
      %v1062 = vadd.f32 0.0, %v1061
      %v1063 = vpop.f32.mrf.mxu0
      %1064 = vmatprep.mubr.f32.mxu0 0.0
      %1065 = vmatmul.mubr.f32.gmra.mxu0 %v985
      %v1066 = vpop.f32.mrf.mxu0
      %v1067 = vadd.f32 0.0, %v1066
      %v1068 = vpop.f32.mrf.mxu0
      %1069 = vmatprep.mubr.f32.mxu0 0.0
      %1070 = vmatmul.mubr.f32.gmra.mxu0 %v987
      %v1071 = vpop.f32.mrf.mxu0
      %v1072 = vadd.f32 0.0, %v1071
      %v1073 = vpop.f32.mrf.mxu0
      %1074 = vdwg.mxu0
      %v1075 = vmul.f32 %v1062, 0.17677669
      %v1076 = vmul.f32 %v1067, 0.17677669
      %v1077 = vmul.f32 %v1072, 0.17677669
      %v1078 = vsel %vm871, -1e+30, %v1075
      %v1079 = vsel %vm872, -1e+30, %v1076
      %v1080 = vsel %vm873, -1e+30, %v1077
      %vm1081 = vcmask 195584
      %v1082 = vsel %vm1081, %v1078, -inf
      %1083 = vmax.xlane.f32.xlu0 %v1082
      %v1084 = vpop.xlane.xlu0 %1083
      %v1085 = vsel %vm1081, %v1079, -inf
      %1086 = vmax.xlane.f32.xlu0 %v1085
      %v1087 = vpop.xlane.xlu0 %1086
      %v1088 = vsel %vm1081, %v1080, -inf
      %1089 = vmax.xlane.f32.xlu0 %v1088
      %v1090 = vpop.xlane.xlu0 %1089
      %v1091 = vsub.f32 %v1078, %v1084
      %v1092 = vsub.f32 %v1079, %v1087
      %v1093 = vsub.f32 %v1080, %v1090
      %v1094 = vmul.f32 %v1091, 1.442695
      %v1095 = vpow.pop %v1094
      %v1096 = vmul.f32 %v1092, 1.442695
      %v1097 = vpow.pop %v1096
      %v1098 = vmul.f32 %v1093, 1.442695
      %v1099 = vpow.pop %v1098
      %v1100 = vsel %vm1081, %v1095, 0.0
      %1101 = vadd.xlane.f32.xlu0 %v1100
      %v1102 = vpop.xlane.xlu0 %1101
      %v1103 = vsel %vm1081, %v1097, 0.0
      %1104 = vadd.xlane.f32.xlu0 %v1103
      %v1105 = vpop.xlane.xlu0 %1104
      %v1106 = vsel %vm1081, %v1099, 0.0
      %1107 = vadd.xlane.f32.xlu0 %v1106
      %v1108 = vpop.xlane.xlu0 %1107
      %v1109 = vrcp.pop %v1102
      %v1110 = vrcp.pop %v1105
      %v1111 = vrcp.pop %v1108
      %v1112 = vmul.f32 %v1102, %v1109
      %v1113 = vmul.f32 %v1105, %v1110
      %v1114 = vmul.f32 %v1108, %v1111
      %v1115 = vsub.f32 2.0, %v1112
      %v1116 = vsub.f32 2.0, %v1113
      %v1117 = vsub.f32 2.0, %v1114
      %v1118 = vmul.f32 %v1109, %v1115
      %v1119 = vmul.f32 %v1110, %v1116
      %v1120 = vmul.f32 %v1111, %v1117
      %v1121 = vmul.f32 %v1095, %v1118
      %v1122 = vmul.f32 %v1097, %v1119
      %v1123 = vmul.f32 %v1099, %v1120
      %v1125 = vsel %vm1081, %v1121, 0
      %v1128 = vsel %vm1081, %v1122, 0
      %v1131 = vsel %vm1081, %v1123, 0
      %1133 = vmatprep.subr.mxu0 0.0
      %1134 = vmatpush1.msra.mxu0 0.0
      %1135 = vmatprep.subr.mxu0 0.0
      %1136 = vmatpush1.msra.mxu0 0.0
      %1137 = vmatprep.subr.mxu0 0.0
      %1138 = vmatpush1.msra.mxu0 0.0
      %1139 = vmatprep.subr.mxu0 0.0
      %1140 = vmatpush1.msra.mxu0 0.0
      %1141 = vmatprep.subr.mxu0 0.0
      %1142 = vmatpush1.msra.mxu0 0.0
      %1143 = vmatprep.subr.mxu0 0.0
      %1144 = vmatpush1.msra.mxu0 0.0
      %1145 = vmatprep.subr.mxu0 0.0
      %1146 = vmatpush1.msra.mxu0 0.0
      %1147 = vmatprep.subr.mxu0 0.0
      %1148 = vmatpush1.msra.mxu0 0.0
      %1149 = vmatprep.subr.mxu0 0.0
      %1150 = vmatpush1.msra.mxu0 0.0
      %1151 = vmatprep.subr.mxu0 0.0
      %1152 = vmatpush1.msra.mxu0 0.0
      %1153 = vmatprep.subr.mxu0 0.0
      %1154 = vmatpush1.msra.mxu0 0.0
      %1155 = vmatprep.subr.mxu0 0.0
      %1156 = vmatpush1.msra.mxu0 0.0
      %1157 = vmatprep.subr.mxu0 0.0
      %1158 = vmatpush1.msra.mxu0 0.0
      %1159 = vmatprep.subr.mxu0 0.0
      %1160 = vmatpush1.msra.mxu0 %v810
      %1161 = vmatprep.subr.mxu0 0.0
      %1162 = vmatpush1.msra.mxu0 %v809
      %1163 = vmatprep.subr.mxu0 0.0
      %1164 = vmatpush1.msra.mxu0 %v808
      %1165 = vmatprep.subr.mxu0 0.0
      %1166 = vmatpush2.msra.mxu0 0.0
      %1167 = vmatprep.subr.mxu0 0.0
      %1168 = vmatpush2.msra.mxu0 0.0
      %1169 = vmatprep.subr.mxu0 0.0
      %1170 = vmatpush2.msra.mxu0 0.0
      %1171 = vmatprep.subr.mxu0 0.0
      %1172 = vmatpush2.msra.mxu0 0.0
      %1173 = vmatprep.subr.mxu0 0.0
      %1174 = vmatpush2.msra.mxu0 0.0
      %1175 = vmatprep.subr.mxu0 0.0
      %1176 = vmatpush2.msra.mxu0 0.0
      %1177 = vmatprep.subr.mxu0 0.0
      %1178 = vmatpush2.msra.mxu0 0.0
      %1179 = vmatprep.subr.mxu0 0.0
      %1180 = vmatpush2.msra.mxu0 0.0
      %1181 = vmatprep.subr.mxu0 0.0
      %1182 = vmatpush2.msra.mxu0 0.0
      %1183 = vmatprep.subr.mxu0 0.0
      %1184 = vmatpush2.msra.mxu0 0.0
      %1185 = vmatprep.subr.mxu0 0.0
      %1186 = vmatpush2.msra.mxu0 0.0
      %1187 = vmatprep.subr.mxu0 0.0
      %1188 = vmatpush2.msra.mxu0 0.0
      %1189 = vmatprep.subr.mxu0 0.0
      %1190 = vmatpush2.msra.mxu0 0.0
      %1191 = vmatprep.subr.mxu0 0.0
      %1192 = vmatpush2.msra.mxu0 0.0
      %1193 = vmatprep.subr.mxu0 0.0
      %1194 = vmatpush2.msra.mxu0 0.0
      %1195 = vmatprep.subr.mxu0 0.0
      %1196 = vmatpush2.msra.mxu0 0.0
      %1197 = vmatprep.mubr.f32.mxu0 0.0
      %1198 = vmatmul.mubr.f32.gmra.mxu0 %v1125
      %v1199 = vpop.f32.mrf.mxu0
      %v1200 = vadd.f32 0.0, %v1199
      %v1201 = vpop.f32.mrf.mxu0
      %1202 = vmatprep.mubr.f32.mxu0 0.0
      %1203 = vmatmul.mubr.f32.gmra.mxu0 %v1128
      %v1204 = vpop.f32.mrf.mxu0
      %v1205 = vadd.f32 0.0, %v1204
      %v1206 = vpop.f32.mrf.mxu0
      %1207 = vmatprep.mubr.f32.mxu0 0.0
      %1208 = vmatmul.mubr.f32.gmra.mxu0 %v1131
      %v1209 = vpop.f32.mrf.mxu0
      %v1210 = vadd.f32 0.0, %v1209
      %v1211 = vpop.f32.mrf.mxu0
      %1212 = vdwg.mxu0
      %1213 = vrot.lane.b32.xlu0 %v961, 64
      %v1214 = vpop.permute.xlu0 %1213
      %1215 = vrot.lane.b32.xlu0 %v966, 64
      %v1216 = vpop.permute.xlu0 %1215
      %1217 = vrot.lane.b32.xlu0 %v971, 64
      %v1218 = vpop.permute.xlu0 %1217
      %1219 = vrot.lane.b32.xlu0 %v961, 32
      %v1220 = vpop.permute.xlu0 %1219
      %1221 = vrot.lane.b32.xlu0 %v966, 32
      %v1222 = vpop.permute.xlu0 %1221
      %1223 = vrot.lane.b32.xlu0 %v971, 32
      %v1224 = vpop.permute.xlu0 %1223
      %v1225 = vsel %vm682, %v1214, 0
      %v1227 = vsel %vm682, %v1216, 0
      %v1229 = vsel %vm682, %v1218, 0
      %v1231 = vsel %vm682, %v1220, 0
      %v1233 = vsel %vm682, %v1222, 0
      %v1235 = vsel %vm682, %v1224, 0
      %1237 = vmatprep.subr.mxu0 0.0
      %1238 = vmatpush1.xpose.msra.mxu0 0.0
      %1239 = vmatprep.subr.mxu0 0.0
      %1240 = vmatpush1.xpose.msra.mxu0 0.0
      %1241 = vmatprep.subr.mxu0 0.0
      %1242 = vmatpush1.xpose.msra.mxu0 0.0
      %1243 = vmatprep.subr.mxu0 0.0
      %1244 = vmatpush1.xpose.msra.mxu0 0.0
      %1245 = vmatprep.subr.mxu0 0.0
      %1246 = vmatpush1.xpose.msra.mxu0 0.0
      %1247 = vmatprep.subr.mxu0 0.0
      %1248 = vmatpush1.xpose.msra.mxu0 0.0
      %1249 = vmatprep.subr.mxu0 0.0
      %1250 = vmatpush1.xpose.msra.mxu0 0.0
      %1251 = vmatprep.subr.mxu0 0.0
      %1252 = vmatpush1.xpose.msra.mxu0 0.0
      %1253 = vmatprep.subr.mxu0 0.0
      %1254 = vmatpush1.xpose.msra.mxu0 0.0
      %1255 = vmatprep.subr.mxu0 0.0
      %1256 = vmatpush1.xpose.msra.mxu0 0.0
      %1257 = vmatprep.subr.mxu0 0.0
      %1258 = vmatpush1.xpose.msra.mxu0 0.0
      %1259 = vmatprep.subr.mxu0 0.0
      %1260 = vmatpush1.xpose.msra.mxu0 0.0
      %1261 = vmatprep.subr.mxu0 0.0
      %1262 = vmatpush1.xpose.msra.mxu0 0.0
      %1263 = vmatprep.subr.mxu0 0.0
      %1264 = vmatpush1.xpose.msra.mxu0 %v1235
      %1265 = vmatprep.subr.mxu0 0.0
      %1266 = vmatpush1.xpose.msra.mxu0 %v1233
      %1267 = vmatprep.subr.mxu0 0.0
      %1268 = vmatpush1.xpose.msra.mxu0 %v1231
      %1269 = vmatprep.subr.mxu0 0.0
      %1270 = vmatpush2.xpose.msra.mxu0 0.0
      %1271 = vmatprep.subr.mxu0 0.0
      %1272 = vmatpush2.xpose.msra.mxu0 0.0
      %1273 = vmatprep.subr.mxu0 0.0
      %1274 = vmatpush2.xpose.msra.mxu0 0.0
      %1275 = vmatprep.subr.mxu0 0.0
      %1276 = vmatpush2.xpose.msra.mxu0 0.0
      %1277 = vmatprep.subr.mxu0 0.0
      %1278 = vmatpush2.xpose.msra.mxu0 0.0
      %1279 = vmatprep.subr.mxu0 0.0
      %1280 = vmatpush2.xpose.msra.mxu0 0.0
      %1281 = vmatprep.subr.mxu0 0.0
      %1282 = vmatpush2.xpose.msra.mxu0 0.0
      %1283 = vmatprep.subr.mxu0 0.0
      %1284 = vmatpush2.xpose.msra.mxu0 0.0
      %1285 = vmatprep.subr.mxu0 0.0
      %1286 = vmatpush2.xpose.msra.mxu0 0.0
      %1287 = vmatprep.subr.mxu0 0.0
      %1288 = vmatpush2.xpose.msra.mxu0 0.0
      %1289 = vmatprep.subr.mxu0 0.0
      %1290 = vmatpush2.xpose.msra.mxu0 0.0
      %1291 = vmatprep.subr.mxu0 0.0
      %1292 = vmatpush2.xpose.msra.mxu0 0.0
      %1293 = vmatprep.subr.mxu0 0.0
      %1294 = vmatpush2.xpose.msra.mxu0 0.0
      %1295 = vmatprep.subr.mxu0 0.0
      %1296 = vmatpush2.xpose.msra.mxu0 0.0
      %1297 = vmatprep.subr.mxu0 0.0
      %1298 = vmatpush2.xpose.msra.mxu0 0.0
      %1299 = vmatprep.subr.mxu0 0.0
      %1300 = vmatpush2.xpose.msra.mxu0 0.0
      %1301 = vmatprep.mubr.f32.mxu0 0.0
      %1302 = vmatmul.mubr.f32.gmra.mxu0 %v1225
      %v1303 = vpop.f32.mrf.mxu0
      %v1304 = vadd.f32 0.0, %v1303
      %v1305 = vpop.f32.mrf.mxu0
      %1306 = vmatprep.mubr.f32.mxu0 0.0
      %1307 = vmatmul.mubr.f32.gmra.mxu0 %v1227
      %v1308 = vpop.f32.mrf.mxu0
      %v1309 = vadd.f32 0.0, %v1308
      %v1310 = vpop.f32.mrf.mxu0
      %1311 = vmatprep.mubr.f32.mxu0 0.0
      %1312 = vmatmul.mubr.f32.gmra.mxu0 %v1229
      %v1313 = vpop.f32.mrf.mxu0
      %v1314 = vadd.f32 0.0, %v1313
      %v1315 = vpop.f32.mrf.mxu0
      %1316 = vdwg.mxu0
      %v1317 = vmul.f32 %v1304, 0.17677669
      %v1318 = vmul.f32 %v1309, 0.17677669
      %v1319 = vmul.f32 %v1314, 0.17677669
      %v1320 = vsel %vm871, -1e+30, %v1317
      %v1321 = vsel %vm872, -1e+30, %v1318
      %v1322 = vsel %vm873, -1e+30, %v1319
      %v1323 = vsel %vm1081, %v1320, -inf
      %1324 = vmax.xlane.f32.xlu0 %v1323
      %v1325 = vpop.xlane.xlu0 %1324
      %v1326 = vsel %vm1081, %v1321, -inf
      %1327 = vmax.xlane.f32.xlu0 %v1326
      %v1328 = vpop.xlane.xlu0 %1327
      %v1329 = vsel %vm1081, %v1322, -inf
      %1330 = vmax.xlane.f32.xlu0 %v1329
      %v1331 = vpop.xlane.xlu0 %1330
      %v1332 = vsub.f32 %v1320, %v1325
      %v1333 = vsub.f32 %v1321, %v1328
      %v1334 = vsub.f32 %v1322, %v1331
      %v1335 = vmul.f32 %v1332, 1.442695
      %v1336 = vpow.pop %v1335
      %v1337 = vmul.f32 %v1333, 1.442695
      %v1338 = vpow.pop %v1337
      %v1339 = vmul.f32 %v1334, 1.442695
      %v1340 = vpow.pop %v1339
      %v1341 = vsel %vm1081, %v1336, 0.0
      %1342 = vadd.xlane.f32.xlu0 %v1341
      %v1343 = vpop.xlane.xlu0 %1342
      %v1344 = vsel %vm1081, %v1338, 0.0
      %1345 = vadd.xlane.f32.xlu0 %v1344
      %v1346 = vpop.xlane.xlu0 %1345
      %v1347 = vsel %vm1081, %v1340, 0.0
      %1348 = vadd.xlane.f32.xlu0 %v1347
      %v1349 = vpop.xlane.xlu0 %1348
      %v1350 = vrcp.pop %v1343
      %v1351 = vrcp.pop %v1346
      %v1352 = vrcp.pop %v1349
      %v1353 = vmul.f32 %v1343, %v1350
      %v1354 = vmul.f32 %v1346, %v1351
      %v1355 = vmul.f32 %v1349, %v1352
      %v1356 = vsub.f32 2.0, %v1353
      %v1357 = vsub.f32 2.0, %v1354
      %v1358 = vsub.f32 2.0, %v1355
      %v1359 = vmul.f32 %v1350, %v1356
      %v1360 = vmul.f32 %v1351, %v1357
      %v1361 = vmul.f32 %v1352, %v1358
      %v1362 = vmul.f32 %v1336, %v1359
      %v1363 = vmul.f32 %v1338, %v1360
      %v1364 = vmul.f32 %v1340, %v1361
      %v1366 = vsel %vm1081, %v1362, 0
      %v1369 = vsel %vm1081, %v1363, 0
      %v1372 = vsel %vm1081, %v1364, 0
      %1374 = vmatprep.subr.mxu0 0.0
      %1375 = vmatpush1.msra.mxu0 0.0
      %1376 = vmatprep.subr.mxu0 0.0
      %1377 = vmatpush1.msra.mxu0 0.0
      %1378 = vmatprep.subr.mxu0 0.0
      %1379 = vmatpush1.msra.mxu0 0.0
      %1380 = vmatprep.subr.mxu0 0.0
      %1381 = vmatpush1.msra.mxu0 0.0
      %1382 = vmatprep.subr.mxu0 0.0
      %1383 = vmatpush1.msra.mxu0 0.0
      %1384 = vmatprep.subr.mxu0 0.0
      %1385 = vmatpush1.msra.mxu0 0.0
      %1386 = vmatprep.subr.mxu0 0.0
      %1387 = vmatpush1.msra.mxu0 0.0
      %1388 = vmatprep.subr.mxu0 0.0
      %1389 = vmatpush1.msra.mxu0 0.0
      %1390 = vmatprep.subr.mxu0 0.0
      %1391 = vmatpush1.msra.mxu0 0.0
      %1392 = vmatprep.subr.mxu0 0.0
      %1393 = vmatpush1.msra.mxu0 0.0
      %1394 = vmatprep.subr.mxu0 0.0
      %1395 = vmatpush1.msra.mxu0 0.0
      %1396 = vmatprep.subr.mxu0 0.0
      %1397 = vmatpush1.msra.mxu0 0.0
      %1398 = vmatprep.subr.mxu0 0.0
      %1399 = vmatpush1.msra.mxu0 0.0
      %1400 = vmatprep.subr.mxu0 0.0
      %1401 = vmatpush1.msra.mxu0 %v810
      %1402 = vmatprep.subr.mxu0 0.0
      %1403 = vmatpush1.msra.mxu0 %v809
      %1404 = vmatprep.subr.mxu0 0.0
      %1405 = vmatpush1.msra.mxu0 %v808
      %1406 = vmatprep.subr.mxu0 0.0
      %1407 = vmatpush2.msra.mxu0 0.0
      %1408 = vmatprep.subr.mxu0 0.0
      %1409 = vmatpush2.msra.mxu0 0.0
      %1410 = vmatprep.subr.mxu0 0.0
      %1411 = vmatpush2.msra.mxu0 0.0
      %1412 = vmatprep.subr.mxu0 0.0
      %1413 = vmatpush2.msra.mxu0 0.0
      %1414 = vmatprep.subr.mxu0 0.0
      %1415 = vmatpush2.msra.mxu0 0.0
      %1416 = vmatprep.subr.mxu0 0.0
      %1417 = vmatpush2.msra.mxu0 0.0
      %1418 = vmatprep.subr.mxu0 0.0
      %1419 = vmatpush2.msra.mxu0 0.0
      %1420 = vmatprep.subr.mxu0 0.0
      %1421 = vmatpush2.msra.mxu0 0.0
      %1422 = vmatprep.subr.mxu0 0.0
      %1423 = vmatpush2.msra.mxu0 0.0
      %1424 = vmatprep.subr.mxu0 0.0
      %1425 = vmatpush2.msra.mxu0 0.0
      %1426 = vmatprep.subr.mxu0 0.0
      %1427 = vmatpush2.msra.mxu0 0.0
      %1428 = vmatprep.subr.mxu0 0.0
      %1429 = vmatpush2.msra.mxu0 0.0
      %1430 = vmatprep.subr.mxu0 0.0
      %1431 = vmatpush2.msra.mxu0 0.0
      %1432 = vmatprep.subr.mxu0 0.0
      %1433 = vmatpush2.msra.mxu0 0.0
      %1434 = vmatprep.subr.mxu0 0.0
      %1435 = vmatpush2.msra.mxu0 0.0
      %1436 = vmatprep.subr.mxu0 0.0
      %1437 = vmatpush2.msra.mxu0 0.0
      %1438 = vmatprep.mubr.f32.mxu0 0.0
      %1439 = vmatmul.mubr.f32.gmra.mxu0 %v1366
      %v1440 = vpop.f32.mrf.mxu0
      %v1441 = vadd.f32 0.0, %v1440
      %v1442 = vpop.f32.mrf.mxu0
      %1443 = vmatprep.mubr.f32.mxu0 0.0
      %1444 = vmatmul.mubr.f32.gmra.mxu0 %v1369
      %v1445 = vpop.f32.mrf.mxu0
      %v1446 = vadd.f32 0.0, %v1445
      %v1447 = vpop.f32.mrf.mxu0
      %1448 = vmatprep.mubr.f32.mxu0 0.0
      %1449 = vmatmul.mubr.f32.gmra.mxu0 %v1372
      %v1450 = vpop.f32.mrf.mxu0
      %v1451 = vadd.f32 0.0, %v1450
      %v1452 = vpop.f32.mrf.mxu0
      %1453 = vdwg.mxu0
      %1454 = vst.msk [vmem:[%s571] sm:$0xff] %vm1081, %v1362
      %1455 = vst.msk [vmem:[%s571 + $0x8] sm:$0xff] %vm1081, %v1363
      %1456 = vst.msk [vmem:[%s571 + $0x10] sm:$0xff] %vm1081, %v1364
      %1460 = vrot.lane.b32.xlu0 %v1441, 32
      %v1461 = vpop.permute.xlu0 %1460
      %1462 = vrot.lane.b32.xlu0 %v1446, 32
      %v1463 = vpop.permute.xlu0 %1462
      %1464 = vrot.lane.b32.xlu0 %v1451, 32
      %v1465 = vpop.permute.xlu0 %1464
      %v1469 = vsel %vm682, %v1200, %v1461
      %v1470 = vsel %vm682, %v1205, %v1463
      %v1471 = vsel %vm682, %v1210, %v1465
      %v1472 = vld [vmem:[%s9] sm:$0xff]
      %v1473 = vld [vmem:[%s9 + $0x8] sm:$0xff]
      %v1474 = vld [vmem:[%s9 + $0x10] sm:$0xff]
      %v1475 = vld [vmem:[%s9 + $0x18] sm:$0xff]
      %v1476 = vld [vmem:[%s9 + $0x20] sm:$0xff]
      %v1477 = vld [vmem:[%s9 + $0x28] sm:$0xff]
      %v1478 = vld [vmem:[%s9 + $0x30] sm:$0xff]
      %v1479 = vld [vmem:[%s9 + $0x38] sm:$0xff]
      %v1481 = vsel %vm590, %v1469, 0
      %v1484 = vsel %vm590, %v1470, 0
      %v1487 = vsel %vm590, %v1471, 0
      %1489 = vmatprep.subr.mxu0 0.0
      %1490 = vmatpush1.msra.mxu0 0.0
      %1491 = vmatprep.subr.mxu0 0.0
      %1492 = vmatpush1.msra.mxu0 0.0
      %1493 = vmatprep.subr.mxu0 0.0
      %1494 = vmatpush1.msra.mxu0 0.0
      %1495 = vmatprep.subr.mxu0 0.0
      %1496 = vmatpush1.msra.mxu0 0.0
      %1497 = vmatprep.subr.mxu0 0.0
      %1498 = vmatpush1.msra.mxu0 0.0
      %1499 = vmatprep.subr.mxu0 0.0
      %1500 = vmatpush1.msra.mxu0 0.0
      %1501 = vmatprep.subr.mxu0 0.0
      %1502 = vmatpush1.msra.mxu0 0.0
      %1503 = vmatprep.subr.mxu0 0.0
      %1504 = vmatpush1.msra.mxu0 0.0
      %1505 = vmatprep.subr.mxu0 0.0
      %1506 = vmatpush1.msra.mxu0 %v1479
      %1507 = vmatprep.subr.mxu0 0.0
      %1508 = vmatpush1.msra.mxu0 %v1478
      %1509 = vmatprep.subr.mxu0 0.0
      %1510 = vmatpush1.msra.mxu0 %v1477
      %1511 = vmatprep.subr.mxu0 0.0
      %1512 = vmatpush1.msra.mxu0 %v1476
      %1513 = vmatprep.subr.mxu0 0.0
      %1514 = vmatpush1.msra.mxu0 %v1475
      %1515 = vmatprep.subr.mxu0 0.0
      %1516 = vmatpush1.msra.mxu0 %v1474
      %1517 = vmatprep.subr.mxu0 0.0
      %1518 = vmatpush1.msra.mxu0 %v1473
      %1519 = vmatprep.subr.mxu0 0.0
      %1520 = vmatpush1.msra.mxu0 %v1472
      %1521 = vmatprep.subr.mxu0 0.0
      %1522 = vmatpush2.msra.mxu0 0.0
      %1523 = vmatprep.subr.mxu0 0.0
      %1524 = vmatpush2.msra.mxu0 0.0
      %1525 = vmatprep.subr.mxu0 0.0
      %1526 = vmatpush2.msra.mxu0 0.0
      %1527 = vmatprep.subr.mxu0 0.0
      %1528 = vmatpush2.msra.mxu0 0.0
      %1529 = vmatprep.subr.mxu0 0.0
      %1530 = vmatpush2.msra.mxu0 0.0
      %1531 = vmatprep.subr.mxu0 0.0
      %1532 = vmatpush2.msra.mxu0 0.0
      %1533 = vmatprep.subr.mxu0 0.0
      %1534 = vmatpush2.msra.mxu0 0.0
      %1535 = vmatprep.subr.mxu0 0.0
      %1536 = vmatpush2.msra.mxu0 0.0
      %1537 = vmatprep.subr.mxu0 0.0
      %1538 = vmatpush2.msra.mxu0 0.0
      %1539 = vmatprep.subr.mxu0 0.0
      %1540 = vmatpush2.msra.mxu0 0.0
      %1541 = vmatprep.subr.mxu0 0.0
      %1542 = vmatpush2.msra.mxu0 0.0
      %1543 = vmatprep.subr.mxu0 0.0
      %1544 = vmatpush2.msra.mxu0 0.0
      %1545 = vmatprep.subr.mxu0 0.0
      %1546 = vmatpush2.msra.mxu0 0.0
      %1547 = vmatprep.subr.mxu0 0.0
      %1548 = vmatpush2.msra.mxu0 0.0
      %1549 = vmatprep.subr.mxu0 0.0
      %1550 = vmatpush2.msra.mxu0 0.0
      %1551 = vmatprep.subr.mxu0 0.0
      %1552 = vmatpush2.msra.mxu0 0.0
      %1553 = vmatprep.mubr.f32.mxu0 0.0
      %1554 = vmatmul.mubr.f32.gmra.mxu0 %v1481
      %v1555 = vpop.f32.mrf.mxu0
      %v1556 = vadd.f32 0.0, %v1555
      %v1557 = vpop.f32.mrf.mxu0
      %1558 = vmatprep.mubr.f32.mxu0 0.0
      %1559 = vmatmul.mubr.f32.gmra.mxu0 %v1484
      %v1560 = vpop.f32.mrf.mxu0
      %v1561 = vadd.f32 0.0, %v1560
      %v1562 = vpop.f32.mrf.mxu0
      %1563 = vmatprep.mubr.f32.mxu0 0.0
      %1564 = vmatmul.mubr.f32.gmra.mxu0 %v1487
      %v1565 = vpop.f32.mrf.mxu0
      %v1566 = vadd.f32 0.0, %v1565
      %v1567 = vpop.f32.mrf.mxu0
      %1568 = vdwg.mxu0
      %v1569 = vld [vmem:[%s10] sm:$0x1]
      %v1570 = vld [vmem:[%s11] sm:$0x1]
      %v1571 = vsel %vm682, %v1556, 0.0
      %1572 = vadd.xlane.f32.xlu0 %v1571
      %v1573 = vpop.xlane.xlu0 %1572
      %v1574 = vsel %vm682, %v1561, 0.0
      %1575 = vadd.xlane.f32.xlu0 %v1574
      %v1576 = vpop.xlane.xlu0 %1575
      %v1577 = vsel %vm682, %v1566, 0.0
      %1578 = vadd.xlane.f32.xlu0 %v1577
      %v1579 = vpop.xlane.xlu0 %1578
      %v1580 = vmul.f32 %v1573, %v692
      %v1581 = vmul.f32 %v1576, %v692
      %v1582 = vmul.f32 %v1579, %v692
      %v1583 = vsub.f32 %v1556, %v1580
      %v1584 = vsub.f32 %v1561, %v1581
      %v1585 = vsub.f32 %v1566, %v1582
      %v1586 = vmul.f32 %v1583, %v1583
      %v1587 = vmul.f32 %v1584, %v1584
      %v1588 = vmul.f32 %v1585, %v1585
      %v1589 = vsel %vm682, %v1586, 0.0
      %1590 = vadd.xlane.f32.xlu0 %v1589
      %v1591 = vpop.xlane.xlu0 %1590
      %v1592 = vsel %vm682, %v1587, 0.0
      %1593 = vadd.xlane.f32.xlu0 %v1592
      %v1594 = vpop.xlane.xlu0 %1593
      %v1595 = vsel %vm682, %v1588, 0.0
      %1596 = vadd.xlane.f32.xlu0 %v1595
      %v1597 = vpop.xlane.xlu0 %1596
      %v1598 = vmul.f32 %v1591, %v692
      %v1599 = vmul.f32 %v1594, %v692
      %v1600 = vmul.f32 %v1597, %v692
      %v1601 = vadd.f32 %v1598, 1e-05
      %v1602 = vadd.f32 %v1599, 1e-05
      %v1603 = vadd.f32 %v1600, 1e-05
      %v1604 = vrsqrt.pop %v1601
      %v1605 = vrsqrt.pop %v1602
      %v1606 = vrsqrt.pop %v1603
      %v1607 = vmul.f32 %v1583, %v1604
      %v1608 = vmul.f32 %v1584, %v1605
      %v1609 = vmul.f32 %v1585, %v1606
      %v1611 = vlaneseq
      %v1612 = vshrl.u32 %v1611, 7
      %v1613 = vsub.s32 0, %v1612
      %v1614 = vrot.slane %v1569, %v1613
      %v1616 = vmul.f32 %v1607, %v1614
      %v1617 = vmul.f32 %v1608, %v1614
      %v1618 = vmul.f32 %v1609, %v1614
      %v1620 = vlaneseq
      %v1621 = vshrl.u32 %v1620, 7
      %v1622 = vsub.s32 0, %v1621
      %v1623 = vrot.slane %v1570, %v1622
      %v1625 = vadd.f32 %v1616, %v1623
      %v1626 = vadd.f32 %v1617, %v1623
      %v1627 = vadd.f32 %v1618, %v1623
      %v1628 = vmax.f32 %v1625, 0.0
      %v1629 = vmax.f32 %v1626, 0.0
      %v1630 = vmax.f32 %v1627, 0.0
      %v1631 = vadd.f32 %v1628, 0.0
      %v1632 = vadd.f32 %v1629, 0.0
      %v1633 = vadd.f32 %v1630, 0.0
      %1637 = vrot.lane.b32.xlu0 %v1556, 96
      %v1638 = vpop.permute.xlu0 %1637
      %1639 = vrot.lane.b32.xlu0 %v1561, 96
      %v1640 = vpop.permute.xlu0 %1639
      %1641 = vrot.lane.b32.xlu0 %v1566, 96
      %v1642 = vpop.permute.xlu0 %1641
      %v1646 = vsel %vm682, %v1638, 0.0
      %1647 = vadd.xlane.f32.xlu0 %v1646
      %v1648 = vpop.xlane.xlu0 %1647
      %v1649 = vsel %vm682, %v1640, 0.0
      %1650 = vadd.xlane.f32.xlu0 %v1649
      %v1651 = vpop.xlane.xlu0 %1650
      %v1652 = vsel %vm682, %v1642, 0.0
      %1653 = vadd.xlane.f32.xlu0 %v1652
      %v1654 = vpop.xlane.xlu0 %1653
      %v1655 = vmul.f32 %v1648, %v692
      %v1656 = vmul.f32 %v1651, %v692
      %v1657 = vmul.f32 %v1654, %v692
      %v1658 = vsub.f32 %v1556, %v1655
      %v1659 = vsub.f32 %v1561, %v1656
      %v1660 = vsub.f32 %v1566, %v1657
      %v1661 = vmul.f32 %v1658, %v1658
      %v1662 = vmul.f32 %v1659, %v1659
      %v1663 = vmul.f32 %v1660, %v1660
      %1667 = vrot.lane.b32.xlu0 %v1661, 96
      %v1668 = vpop.permute.xlu0 %1667
      %1669 = vrot.lane.b32.xlu0 %v1662, 96
      %v1670 = vpop.permute.xlu0 %1669
      %1671 = vrot.lane.b32.xlu0 %v1663, 96
      %v1672 = vpop.permute.xlu0 %1671
      %v1676 = vsel %vm682, %v1668, 0.0
      %1677 = vadd.xlane.f32.xlu0 %v1676
      %v1678 = vpop.xlane.xlu0 %1677
      %v1679 = vsel %vm682, %v1670, 0.0
      %1680 = vadd.xlane.f32.xlu0 %v1679
      %v1681 = vpop.xlane.xlu0 %1680
      %v1682 = vsel %vm682, %v1672, 0.0
      %1683 = vadd.xlane.f32.xlu0 %v1682
      %v1684 = vpop.xlane.xlu0 %1683
      %v1685 = vmul.f32 %v1678, %v692
      %v1686 = vmul.f32 %v1681, %v692
      %v1687 = vmul.f32 %v1684, %v692
      %v1688 = vadd.f32 %v1685, 1e-05
      %v1689 = vadd.f32 %v1686, 1e-05
      %v1690 = vadd.f32 %v1687, 1e-05
      %v1691 = vrsqrt.pop %v1688
      %v1692 = vrsqrt.pop %v1689
      %v1693 = vrsqrt.pop %v1690
      %v1694 = vmul.f32 %v1658, %v1691
      %v1695 = vmul.f32 %v1659, %v1692
      %v1696 = vmul.f32 %v1660, %v1693
      %v1697 = vmul.f32 %v1694, %v1614
      %v1698 = vmul.f32 %v1695, %v1614
      %v1699 = vmul.f32 %v1696, %v1614
      %v1700 = vadd.f32 %v1697, %v1623
      %v1701 = vadd.f32 %v1698, %v1623
      %v1702 = vadd.f32 %v1699, %v1623
      %v1703 = vmax.f32 %v1700, 0.0
      %v1704 = vmax.f32 %v1701, 0.0
      %v1705 = vmax.f32 %v1702, 0.0
      %1709 = vrot.lane.b32.xlu0 %v1703, 96
      %v1710 = vpop.permute.xlu0 %1709
      %1711 = vrot.lane.b32.xlu0 %v1704, 96
      %v1712 = vpop.permute.xlu0 %1711
      %1713 = vrot.lane.b32.xlu0 %v1705, 96
      %v1714 = vpop.permute.xlu0 %1713
      %v1718 = vadd.f32 %v1631, %v1710
      %v1719 = vadd.f32 %v1632, %v1712
      %v1720 = vadd.f32 %v1633, %v1714
      %v1721 = vadd.f32 %v1718, %v808
      %v1722 = vadd.f32 %v1719, %v809
      %v1723 = vadd.f32 %v1720, %v810
      %v1724 = vld [vmem:[%s12] sm:$0xff]
      %v1726 = vsel %vm1081, %v1724, 0
      %1728 = vmatprep.subr.mxu0 0.0
      %1729 = vmatpush1.msra.mxu0 0.0
      %1730 = vmatprep.subr.mxu0 0.0
      %1731 = vmatpush1.msra.mxu0 0.0
      %1732 = vmatprep.subr.mxu0 0.0
      %1733 = vmatpush1.msra.mxu0 0.0
      %1734 = vmatprep.subr.mxu0 0.0
      %1735 = vmatpush1.msra.mxu0 0.0
      %1736 = vmatprep.subr.mxu0 0.0
      %1737 = vmatpush1.msra.mxu0 0.0
      %1738 = vmatprep.subr.mxu0 0.0
      %1739 = vmatpush1.msra.mxu0 0.0
      %1740 = vmatprep.subr.mxu0 0.0
      %1741 = vmatpush1.msra.mxu0 0.0
      %1742 = vmatprep.subr.mxu0 0.0
      %1743 = vmatpush1.msra.mxu0 0.0
      %1744 = vmatprep.subr.mxu0 0.0
      %1745 = vmatpush1.msra.mxu0 0.0
      %1746 = vmatprep.subr.mxu0 0.0
      %1747 = vmatpush1.msra.mxu0 0.0
      %1748 = vmatprep.subr.mxu0 0.0
      %1749 = vmatpush1.msra.mxu0 0.0
      %1750 = vmatprep.subr.mxu0 0.0
      %1751 = vmatpush1.msra.mxu0 0.0
      %1752 = vmatprep.subr.mxu0 0.0
      %1753 = vmatpush1.msra.mxu0 0.0
      %1754 = vmatprep.subr.mxu0 0.0
      %1755 = vmatpush1.msra.mxu0 %v1723
      %1756 = vmatprep.subr.mxu0 0.0
      %1757 = vmatpush1.msra.mxu0 %v1722
      %1758 = vmatprep.subr.mxu0 0.0
      %1759 = vmatpush1.msra.mxu0 %v1721
      %1760 = vmatprep.subr.mxu0 0.0
      %1761 = vmatpush2.msra.mxu0 0.0
      %1762 = vmatprep.subr.mxu0 0.0
      %1763 = vmatpush2.msra.mxu0 0.0
      %1764 = vmatprep.subr.mxu0 0.0
      %1765 = vmatpush2.msra.mxu0 0.0
      %1766 = vmatprep.subr.mxu0 0.0
      %1767 = vmatpush2.msra.mxu0 0.0
      %1768 = vmatprep.subr.mxu0 0.0
      %1769 = vmatpush2.msra.mxu0 0.0
      %1770 = vmatprep.subr.mxu0 0.0
      %1771 = vmatpush2.msra.mxu0 0.0
      %1772 = vmatprep.subr.mxu0 0.0
      %1773 = vmatpush2.msra.mxu0 0.0
      %1774 = vmatprep.subr.mxu0 0.0
      %1775 = vmatpush2.msra.mxu0 0.0
      %1776 = vmatprep.subr.mxu0 0.0
      %1777 = vmatpush2.msra.mxu0 0.0
      %1778 = vmatprep.subr.mxu0 0.0
      %1779 = vmatpush2.msra.mxu0 0.0
      %1780 = vmatprep.subr.mxu0 0.0
      %1781 = vmatpush2.msra.mxu0 0.0
      %1782 = vmatprep.subr.mxu0 0.0
      %1783 = vmatpush2.msra.mxu0 0.0
      %1784 = vmatprep.subr.mxu0 0.0
      %1785 = vmatpush2.msra.mxu0 0.0
      %1786 = vmatprep.subr.mxu0 0.0
      %1787 = vmatpush2.msra.mxu0 0.0
      %1788 = vmatprep.subr.mxu0 0.0
      %1789 = vmatpush2.msra.mxu0 0.0
      %1790 = vmatprep.subr.mxu0 0.0
      %1791 = vmatpush2.msra.mxu0 0.0
      %1792 = vmatprep.mubr.f32.mxu0 0.0
      %1793 = vmatmul.mubr.f32.gmra.mxu0 %v1726
      %v1794 = vpop.f32.mrf.mxu0
      %v1795 = vadd.f32 0.0, %v1794
      %v1796 = vpop.f32.mrf.mxu0
      %1797 = vdwg.mxu0
      %v1798 = vsel %vm805, %v1721, -1e+30
      %v1799 = vsel %vm806, %v1722, -1e+30
      %v1800 = vsel %vm807, %v1723, -1e+30
      %v1801 = vsel %vm682, %v1798, -inf
      %v1802 = vrot.slane %v1801, 4
      %v1803 = vmax.f32 %v1801, %v1802
      %v1804 = vrot.slane %v1803, 2
      %v1805 = vmax.f32 %v1803, %v1804
      %v1806 = vrot.slane %v1805, 1
      %v1807 = vmax.f32 %v1805, %v1806
      %v1808 = vsel %vm682, %v1799, -inf
      %v1809 = vrot.slane %v1808, 4
      %v1810 = vmax.f32 %v1808, %v1809
      %v1811 = vrot.slane %v1810, 2
      %v1812 = vmax.f32 %v1810, %v1811
      %v1813 = vrot.slane %v1812, 1
      %v1814 = vmax.f32 %v1812, %v1813
      %v1815 = vadd.f32 %v1807, %v1814
      %v1816 = vsel %vm682, %v1800, -inf
      %v1817 = vrot.slane %v1816, 4
      %v1818 = vmax.f32 %v1816, %v1817
      %v1819 = vrot.slane %v1818, 2
      %v1820 = vmax.f32 %v1818, %v1819
      %v1821 = vrot.slane %v1820, 1
      %v1822 = vmax.f32 %v1820, %v1821
      %v1823 = vadd.f32 %v1815, %v1822
      %v1824 = vmul.f32 %v1823, 0.33333334
      %v1825 = vld [vmem:[%s13] sm:$0xff]
      %v1826 = vld [vmem:[%s13 + $0x8] sm:$0xff]
      %v1827 = vld [vmem:[%s13 + $0x10] sm:$0xff]
      %v1828 = vld [vmem:[%s13 + $0x18] sm:$0xff]
      %v1829 = vld [vmem:[%s14] sm:$0x1]
      %v1831 = vlaneseq
      %v1832 = vshrl.u32 %v1831, 7
      %v1833 = vsub.s32 0, %v1832
      %v1834 = vrot.slane %v1829, %v1833
      %v1837 = vsel %vm682, %v1795, 0
      %v1840 = vsel %vm682, %v1824, 0
      %1842 = vmatprep.subr.mxu0 0.0
      %1843 = vmatpush1.msra.mxu0 0.0
      %1844 = vmatprep.subr.mxu0 0.0
      %1845 = vmatpush1.msra.mxu0 0.0
      %1846 = vmatprep.subr.mxu0 0.0
      %1847 = vmatpush1.msra.mxu0 0.0
      %1848 = vmatprep.subr.mxu0 0.0
      %1849 = vmatpush1.msra.mxu0 0.0
      %1850 = vmatprep.subr.mxu0 0.0
      %1851 = vmatpush1.msra.mxu0 0.0
      %1852 = vmatprep.subr.mxu0 0.0
      %1853 = vmatpush1.msra.mxu0 0.0
      %1854 = vmatprep.subr.mxu0 0.0
      %1855 = vmatpush1.msra.mxu0 0.0
      %1856 = vmatprep.subr.mxu0 0.0
      %1857 = vmatpush1.msra.mxu0 0.0
      %1858 = vmatprep.subr.mxu0 0.0
      %1859 = vmatpush1.msra.mxu0 0.0
      %1860 = vmatprep.subr.mxu0 0.0
      %1861 = vmatpush1.msra.mxu0 0.0
      %1862 = vmatprep.subr.mxu0 0.0
      %1863 = vmatpush1.msra.mxu0 0.0
      %1864 = vmatprep.subr.mxu0 0.0
      %1865 = vmatpush1.msra.mxu0 0.0
      %1866 = vmatprep.subr.mxu0 0.0
      %1867 = vmatpush1.msra.mxu0 %v1828
      %1868 = vmatprep.subr.mxu0 0.0
      %1869 = vmatpush1.msra.mxu0 %v1827
      %1870 = vmatprep.subr.mxu0 0.0
      %1871 = vmatpush1.msra.mxu0 %v1826
      %1872 = vmatprep.subr.mxu0 0.0
      %1873 = vmatpush1.msra.mxu0 %v1825
      %1874 = vmatprep.subr.mxu0 0.0
      %1875 = vmatpush2.msra.mxu0 0.0
      %1876 = vmatprep.subr.mxu0 0.0
      %1877 = vmatpush2.msra.mxu0 0.0
      %1878 = vmatprep.subr.mxu0 0.0
      %1879 = vmatpush2.msra.mxu0 0.0
      %1880 = vmatprep.subr.mxu0 0.0
      %1881 = vmatpush2.msra.mxu0 0.0
      %1882 = vmatprep.subr.mxu0 0.0
      %1883 = vmatpush2.msra.mxu0 0.0
      %1884 = vmatprep.subr.mxu0 0.0
      %1885 = vmatpush2.msra.mxu0 0.0
      %1886 = vmatprep.subr.mxu0 0.0
      %1887 = vmatpush2.msra.mxu0 0.0
      %1888 = vmatprep.subr.mxu0 0.0
      %1889 = vmatpush2.msra.mxu0 0.0
      %1890 = vmatprep.subr.mxu0 0.0
      %1891 = vmatpush2.msra.mxu0 0.0
      %1892 = vmatprep.subr.mxu0 0.0
      %1893 = vmatpush2.msra.mxu0 0.0
      %1894 = vmatprep.subr.mxu0 0.0
      %1895 = vmatpush2.msra.mxu0 0.0
      %1896 = vmatprep.subr.mxu0 0.0
      %1897 = vmatpush2.msra.mxu0 0.0
      %1898 = vmatprep.subr.mxu0 0.0
      %1899 = vmatpush2.msra.mxu0 0.0
      %1900 = vmatprep.subr.mxu0 0.0
      %1901 = vmatpush2.msra.mxu0 0.0
      %1902 = vmatprep.subr.mxu0 0.0
      %1903 = vmatpush2.msra.mxu0 0.0
      %1904 = vmatprep.subr.mxu0 0.0
      %1905 = vmatpush2.msra.mxu0 0.0
      %1906 = vmatprep.mubr.f32.mxu0 0.0
      %1907 = vmatmul.mubr.f32.gmra.mxu0 %v1837
      %v1908 = vpop.f32.mrf.mxu0
      %v1909 = vadd.f32 %v1834, %v1908
      %v1910 = vpop.f32.mrf.mxu0
      %1911 = vmatprep.mubr.f32.mxu0 0.0
      %1912 = vmatmul.mubr.f32.gmra.mxu0 %v1840
      %v1913 = vpop.f32.mrf.mxu0
      %v1914 = vadd.f32 %v1834, %v1913
      %v1915 = vpop.f32.mrf.mxu0
      %1916 = vdwg.mxu0
      %1917 = vst [vmem:[%s566] sm:$0xff] %v1909
      %1918 = vst [vmem:[%s566 + $0x8] sm:$0xff] %v1914
      %p1919 = scmp.lt.s32.totalorder %s28, 1
      %s1920 = scalar_select %p1919, %s28, 1
      %s1921 = smul.addr %s1920, 2
      %s1922 = smul.addr %s1921, 8
      %s1923 = scalar_lea.vmem %s15, %s1922
      %p1924 = scmp.lt.s32.totalorder %s28, 1
      %s1925 = scalar_select %p1924, %s28, 1
      %s1926 = smul.addr %s1925, 3
      %s1927 = smul.addr %s1926, 8
      %s1928 = scalar_lea.vmem %s16, %s1927
      // Predicated region
      $region81: #{gcnnet_collective_forward.1} parent=79 // pred_check
        %p1929 = pneg %p376
      $region82: #{gcnnet_collective_forward.1} parent=79 // pred_check_branch
        %1931 = sbr.rel (%p1929) target = $region84
      $region83: #{gcnnet_collective_forward.1} parent=79 // pred_region
        _
      $region84: #{gcnnet_collective_forward.1} parent=79 // pred_fallthru
        _
      // Predicated region
      $region85: #{gcnnet_collective_forward.1} parent=79 // pred_check
        %p1932 = pneg %p402
      $region86: #{gcnnet_collective_forward.1} parent=79 // pred_check_branch
        %1934 = sbr.rel (%p1932) target = $region88
      $region87: #{gcnnet_collective_forward.1} parent=79 // pred_region
        _
      $region88: #{gcnnet_collective_forward.1} parent=79 // pred_fallthru
        _
    $region80: #{gcnnet_collective_forward.1} parent=5 // pred_fallthru
      _
    %p1935 = scmp.le.s32.totalorder 2, %s23
    // Predicated region
    $region89: #{gcnnet_collective_forward.1} parent=5 // pred_check
      %p1936 = pneg %p1935
    $region90: #{gcnnet_collective_forward.1} parent=5 // pred_check_branch
      %1938 = sbr.rel (%p1936) target = $region92
    $region91: #{gcnnet_collective_forward.1} parent=5 // pred_region
      %s1939 = ssub.s32 %s23, 2
      // Predicated region
      $region93: #{gcnnet_collective_forward.1} parent=91 // pred_check
        %p1940 = pneg %p382
      $region94: #{gcnnet_collective_forward.1} parent=91 // pred_check_branch
        %1942 = sbr.rel (%p1940) target = $region96
      $region95: #{gcnnet_collective_forward.1} parent=91 // pred_region
        %p1943 = scmp.lt.s32.totalorder %s29, 1
        %s1944 = scalar_select %p1943, %s29, 1
        %s1945 = smul.addr %s1944, 2
        %s1946 = smul.addr %s1945, 8
        %s1947 = scalar_lea.vmem %s15, %s1946
      $region96: #{gcnnet_collective_forward.1} parent=91 // pred_fallthru
        _
      // Predicated region
      $region97: #{gcnnet_collective_forward.1} parent=91 // pred_check
        %p1948 = pneg %p408
      $region98: #{gcnnet_collective_forward.1} parent=91 // pred_check_branch
        %1950 = sbr.rel (%p1948) target = $region100
      $region99: #{gcnnet_collective_forward.1} parent=91 // pred_region
        %p1951 = scmp.lt.s32.totalorder %s29, 1
        %s1952 = scalar_select %p1951, %s29, 1
        %s1953 = smul.addr %s1952, 3
        %s1954 = smul.addr %s1953, 8
        %s1955 = scalar_lea.vmem %s16, %s1954
      $region100: #{gcnnet_collective_forward.1} parent=91 // pred_fallthru
        _
    $region92: #{gcnnet_collective_forward.1} parent=5 // pred_fallthru
      _
  $region6: #{gcnnet_collective_forward.1} parent=0 // loop_footer
    %s27 = sadd.s32 1, %s23
  $region7: #{gcnnet_collective_forward.1} parent=0 // loop_footer_branch
    %22 = sbr.rel target = $region3
  $region8: #{gcnnet_collective_forward.1} parent=0 // loop_exit
    _

</llo_original>
